<compile_context>
chip_gen: v6e
topology: v6e:2x2x1
jax: 0.10.0
libtpu: 0.0.40
codegen_flags: <defaults>
</compile_context>

<pallas_src>
import functools
import numpy as np
import jax
import jax.numpy as jnp
from jax import lax
from jax.experimental import pallas as pl
from jax.experimental.pallas import tpu as pltpu

LN_EPS = 1e-5     # torch.nn.LayerNorm default eps
ATTN_EPS = 1e-6   # Rotary_LoFTREncoderLayer.eps


# ----------------------------- kernel helpers ------------------------------

def _elu_plus_one(v):
    # elu(x) + 1, exp arg clamped to avoid inf intermediates
    return jnp.where(v > 0, v, jnp.exp(jnp.minimum(v, 0.0)) - 1.0) + 1.0


def _layer_norm(v, w, b):
    mean = jnp.mean(v, axis=-1, keepdims=True)
    c = v - mean
    var = jnp.mean(c * c, axis=-1, keepdims=True)
    return c * lax.rsqrt(var + LN_EPS) * w + b


def _even_lane_mask(c):
    # [1, c] bool, True on even lanes (computed once per kernel invocation)
    lane = lax.broadcasted_iota(jnp.int32, (1, c), 1)
    return (lane % 2) == 0


def _pair_swap(x, even_mask):
    # out[..., 2i] = x[..., 2i+1]; out[..., 2i+1] = x[..., 2i]
    up = jnp.concatenate([x[:, 1:], x[:, :1]], axis=1)    # up[j] = x[(j+1) % c]
    dn = jnp.concatenate([x[:, -1:], x[:, :-1]], axis=1)  # dn[j] = x[(j-1) % c]
    return jnp.where(even_mask, up, dn)


def _embed_rotary(x, cos, signed_sin, even_mask):
    # RoFPE.embed_rotary with the +/-1 sign pre-folded into `signed_sin`.
    return x * cos + _pair_swap(x, even_mask) * signed_sin


# ----------------------- Stage 1: KV / K-sum build kernel -------------------

def _kv_kernel(src_ref, kc_ref, ks_ref, wk_ref, wv_ref,
               kv_ref, ksum_ref, kv_acc, ksum_acc,
               *, s_valid, tile_s, mask_rows):
    s_idx = pl.program_id(1)

    @pl.when(s_idx == 0)
    def _():
        kv_acc[...] = jnp.zeros_like(kv_acc)
        ksum_acc[...] = jnp.zeros_like(ksum_acc)

    src_b = src_ref[...].astype(jnp.bfloat16)                        # [tS, C]
    key = jnp.dot(src_b, wk_ref[...], preferred_element_type=jnp.float32)
    val = jnp.dot(src_b, wv_ref[...], preferred_element_type=jnp.float32)
    phi = _elu_plus_one(key)                                         # [tS, C] f32

    even = _even_lane_mask(key.shape[-1])
    kcos, ksin = kc_ref[...], ks_ref[...]                            # bf16 planes
    Kp = _embed_rotary(key, kcos, ksin, even)                        # [tS, C] f32
    Vp = _embed_rotary(val, kcos, ksin, even)                        # [tS, C] f32

    if mask_rows:
        # zero contributions of zero-padded source rows
        row = s_idx * tile_s + lax.broadcasted_iota(jnp.int32, (tile_s, 1), 0)
        valid = (row < s_valid).astype(jnp.float32)                  # [tS, 1]
        phi = phi * valid
        Kp = Kp * valid

    ksum_acc[...] += jnp.sum(phi, axis=0, keepdims=True)             # [1, C]
    # KV += Kp^T @ Vp, contracting axis 0 directly on the MXU (no transpose)
    kv_acc[...] += lax.dot_general(
        Kp.astype(jnp.bfloat16), Vp.astype(jnp.bfloat16),
        dimension_numbers=(((0,), (0,)), ((), ())),
        preferred_element_type=jnp.float32)

    @pl.when(s_idx == pl.num_programs(1) - 1)
    def _():
        kv_ref[...] = kv_acc[...]
        ksum_ref[...] = ksum_acc[...]


# ------------------- Stage 2: per-L-tile encoder-layer kernel ---------------

def _encoder_kernel(x_ref, qc_ref, qs_ref, kv_ref, nm_ref,
                    wq_ref, wm_ref, w1x_ref, w1m_ref, w2_ref,
                    ln1w_ref, ln1b_ref, ln2w_ref, ln2b_ref, out_ref):
    x = x_ref[...]                                                   # [tL, C] f32
    x_b = x.astype(jnp.bfloat16)
    query = jnp.dot(x_b, wq_ref[...], preferred_element_type=jnp.float32)

    even = _even_lane_mask(query.shape[-1])
    Qp = _embed_rotary(query, qc_ref[...], qs_ref[...], even).astype(jnp.bfloat16)
    Q_b = _elu_plus_one(query).astype(jnp.bfloat16)

    # linear-attention normalizer: per-head sum_d Q[l,d]*ksum[d], broadcast over
    # that head's channels via the precomputed ksum-scaled head mask (bf16 MXU).
    denom = jnp.dot(Q_b, nm_ref[...], preferred_element_type=jnp.float32) + ATTN_EPS
    # (1/v_len on values and *v_len on the output cancel exactly, so neither appears)
    msg = jnp.dot(Qp, kv_ref[...], preferred_element_type=jnp.float32) / denom

    # merge + norm1
    msg = jnp.dot(msg.astype(jnp.bfloat16), wm_ref[...],
                  preferred_element_type=jnp.float32)
    msg = _layer_norm(msg, ln1w_ref[...], ln1b_ref[...])

    # mlp([x, message]) without materializing the concat: x@w1x + msg@w1m
    hidden = (jnp.dot(x_b, w1x_ref[...], preferred_element_type=jnp.float32) +
              jnp.dot(msg.astype(jnp.bfloat16), w1m_ref[...],
                      preferred_element_type=jnp.float32))
    hidden = jnp.maximum(hidden, 0.0).astype(jnp.bfloat16)
    msg2 = jnp.dot(hidden, w2_ref[...], preferred_element_type=jnp.float32)
    msg2 = _layer_norm(msg2, ln2w_ref[...], ln2b_ref[...])

    out_ref[...] = x + msg2


# --------------------------- one-time preparation ---------------------------

def _head_mask(c, nhead):
    h = np.arange(c) // (c // nhead)
    return jnp.asarray((h[:, None] == h[None, :]).astype(np.float32))


def prepare_layer_params(params, nhead):
    """Pre-transpose to [in, out], split w1, cast MXU weights to bf16, head mask."""
    c = params['wq'].shape[0]
    w1t = params['w1'].T                         # [2C, 2C] (in -> out)
    return {
        'hmask': _head_mask(c, nhead),
        'wq': params['wq'].T.astype(jnp.bfloat16),
        'wk': params['wk'].T.astype(jnp.bfloat16),
        'wv': params['wv'].T.astype(jnp.bfloat16),
        'wm': params['wm'].T.astype(jnp.bfloat16),
        'w1x': w1t[:c].astype(jnp.bfloat16),     # acts on x
        'w1m': w1t[c:].astype(jnp.bfloat16),     # acts on message
        'w2': params['w2'].T.astype(jnp.bfloat16),
        'ln1w': params['ln1w'], 'ln1b': params['ln1b'],
        'ln2w': params['ln2w'], 'ln2b': params['ln2b'],
    }


def prepare_pe(pe):
    """[N, L, C, 2] -> (cos, sign*sin) bf16 planes; sign=-1 even lanes, +1 odd."""
    c = pe.shape[2]
    sign = jnp.asarray(np.where(np.arange(c) % 2 == 0, -1.0, 1.0).astype(np.float32))
    cos = pe[..., 0].astype(jnp.bfloat16)
    ssin = (pe[..., 1] * sign).astype(jnp.bfloat16)
    return cos, ssin


# ------------------------------ JAX wrappers -------------------------------

def _round_up(n, m):
    return ((n + m - 1) // m) * m


def _pick_tile(n, target=512):
    """Largest tile <= target that is a multiple of 16; prefer exact divisors."""
    n16 = _round_up(n, 16)
    if n16 <= target:
        return n16
    for t in range(target, 15, -16):
        if n % t == 0:
            return t
    return target   # caller pads to a multiple of the tile


def _pad_rows(a, rows):
    if a.shape[1] == rows:
        return a
    return jnp.pad(a, ((0, 0), (0, rows - a.shape[1]), (0, 0)))


def _build_kv(source, k_cos, k_sin, wk, wv):
    """Per-batch KV [N,C,C] (unmasked, f32) and K-sum [N,1,C] over the source seq."""
    N, S, C = source.shape
    tS = _pick_tile(S)
    S_pad = _round_up(S, tS)
    num_s = S_pad // tS
    mask_rows = (S_pad != S)

    source = _pad_rows(source, S_pad)
    k_cos = _pad_rows(k_cos, S_pad)
    k_sin = _pad_rows(k_sin, S_pad)

    seq = pl.BlockSpec((None, tS, C), lambda b, s: (b, s, 0))

    def const(shape):
        return pl.BlockSpec(shape, lambda b, s: (0, 0))

    kernel = functools.partial(_kv_kernel, s_valid=S, tile_s=tS, mask_rows=mask_rows)

    kv, ksum = pl.pallas_call(
        kernel,
        out_shape=(jax.ShapeDtypeStruct((N, C, C), jnp.float32),
                   jax.ShapeDtypeStruct((N, 1, C), jnp.float32)),
        grid_spec=pltpu.PrefetchScalarGridSpec(
            num_scalar_prefetch=0,
            grid=(N, num_s),
            in_specs=[seq, seq, seq,                       # source, k_cos, k_sin
                      const((C, C)), const((C, C))],       # wk, wv
            out_specs=[pl.BlockSpec((None, C, C), lambda b, s: (b, 0, 0)),
                       pl.BlockSpec((None, 1, C), lambda b, s: (b, 0, 0))],
            scratch_shapes=[pltpu.VMEM((C, C), jnp.float32),
                            pltpu.VMEM((1, C), jnp.float32)]),
        compiler_params=pltpu.CompilerParams(
            dimension_semantics=("parallel", "arbitrary")),
    )(source, k_cos, k_sin, wk, wv)
    return kv, ksum


def rotary_encoder_layer(x, source, x_cos, x_sin, s_cos, s_sin, p):
    """One Rotary_LoFTREncoderLayer forward (masks=None) with prepared params `p`."""
    N, L, C = x.shape

    # --- stage 1: per-batch KV / K-sum over the source sequence (tiled over S)
    kv_raw, ksum = _build_kv(source, s_cos, s_sin, p['wk'], p['wv'])
    hm = p['hmask']
    kv = (kv_raw * hm[None]).astype(jnp.bfloat16)                      # [N, C, C]
    nmat = (jnp.swapaxes(ksum, 1, 2) * hm[None]).astype(jnp.bfloat16)  # [N, C, C]

    # --- stage 2: per-row message + merge + MLP, tiled over L
    tL = _pick_tile(L)
    L_pad = _round_up(L, tL)
    num_l = L_pad // tL
    x_p = _pad_rows(x, L_pad)
    qc = _pad_rows(x_cos, L_pad)
    qs = _pad_rows(x_sin, L_pad)

    seq = pl.BlockSpec((None, tL, C), lambda b, l: (b, l, 0))
    per_b = pl.BlockSpec((None, C, C), lambda b, l: (b, 0, 0))

    def const(shape):
        return pl.BlockSpec(shape, lambda b, l: (0, 0))

    # generous scoped-VMEM estimate (double-buffered blocks + f32 temporaries)
    blk = (tL * C * (4 + 2 + 2 + 4)            # x, cos, sin, out
           + 2 * C * C * 2                     # kv, nmat (bf16)
           + (2 * C * C + 2 * C * 2 * C + 2 * C * C) * 2   # weights (bf16)
           + 4 * C * 4)                        # LN params
    temps = tL * C * 4 * 10 + tL * 2 * C * 4
    vmem_limit = int(min(max(2 * blk + temps + (4 << 20), 32 << 20), 56 << 20))

    out = pl.pallas_call(
        _encoder_kernel,
        out_shape=jax.ShapeDtypeStruct((N, L_pad, C), jnp.float32),
        grid_spec=pltpu.PrefetchScalarGridSpec(
            num_scalar_prefetch=0,
            grid=(N, num_l),
            in_specs=[seq, seq, seq,                       # x, q_cos, q_signed_sin
                      per_b, per_b,                        # kv, normalizer matrix
                      const((C, C)), const((C, C)),        # wq, wm
                      const((C, 2 * C)), const((C, 2 * C)),  # w1x, w1m
                      const((2 * C, C)),                   # w2
                      const((1, C)), const((1, C)), const((1, C)), const((1, C))],
            out_specs=seq),
        compiler_params=pltpu.CompilerParams(
            dimension_semantics=("parallel", "parallel"),
            vmem_limit_bytes=vmem_limit),
    )(x_p, qc, qs, kv, nmat,
      p['wq'], p['wm'], p['w1x'], p['w1m'], p['w2'],
      p['ln1w'], p['ln1b'], p['ln2w'], p['ln2b'])

    if L_pad != L:
        out = out[:, :L]
    return out


def local_feature_transformer(feat0, feat1, pe0, pe1, layer_params, layer_names,
                              nhead, only_self=False):
    """LocalFeatureTransformer.forward (attention='linear', masks=None)."""
    pe0c, pe0s = prepare_pe(pe0)
    pe1c, pe1s = prepare_pe(pe1)
    prepped = [prepare_layer_params(p, nhead) for p in layer_params]
    for p, name in zip(prepped, layer_names):
        if name == 'self':
            if only_self:
                # matches the torch module: the self layer is applied to feat0 twice
                feat0 = rotary_encoder_layer(feat0, feat0, pe0c, pe0s, pe0c, pe0s, p)
            feat0 = rotary_encoder_layer(feat0, feat0, pe0c, pe0s, pe0c, pe0s, p)
            feat1 = rotary_encoder_layer(feat1, feat1, pe1c, pe1s, pe1c, pe1s, p)
        elif name == 'cross':
            feat0 = rotary_encoder_layer(feat0, feat1, pe0c, pe0s, pe1c, pe1s, p)
            feat1 = rotary_encoder_layer(feat1, feat0, pe1c, pe1s, pe0c, pe0s, p)
        else:
            raise KeyError(name)
    if only_self:
        return feat0
    return feat0, feat1


# ------------------------- deterministic parameters ------------------------

def _xavier_uniform(key, shape):
    fan_out, fan_in = shape        # torch Linear weight is [out, in]
    a = float(np.sqrt(6.0 / (fan_in + fan_out)))
    return jax.random.uniform(key, shape, jnp.float32, -a, a)


def init_layer_params(key, d_model):
    ks = jax.random.split(key, 6)
    return {
        'wq': _xavier_uniform(ks[0], (d_model, d_model)),
        'wk': _xavier_uniform(ks[1], (d_model, d_model)),
        'wv': _xavier_uniform(ks[2], (d_model, d_model)),
        'wm': _xavier_uniform(ks[3], (d_model, d_model)),
        'w1': _xavier_uniform(ks[4], (2 * d_model, 2 * d_model)),
        'w2': _xavier_uniform(ks[5], (d_model, 2 * d_model)),
        'ln1w': jnp.ones((1, d_model), jnp.float32),
        'ln1b': jnp.zeros((1, d_model), jnp.float32),
        'ln2w': jnp.ones((1, d_model), jnp.float32),
        'ln2b': jnp.zeros((1, d_model), jnp.float32),
    }


# ------------------------------ pure-JAX reference -------------------------

def _embed_rotary_ref(x, cos, sin):
    xp = x.reshape(x.shape[0], x.shape[1], -1, 2)
    x2 = jnp.stack([-xp[..., 1], xp[..., 0]], axis=-1).reshape(x.shape)
    return x * cos + x2 * sin


def rotary_encoder_layer_ref(x, source, x_pe, source_pe, p, nhead):
    N, L, C = x.shape
    S = source.shape[1]
    D = C // nhead
    q = x @ p['wq'].T
    k = source @ p['wk'].T
    v = source @ p['wv'].T
    Q = jax.nn.elu(q) + 1.0
    K = jax.nn.elu(k) + 1.0
    qc, qs = x_pe[..., 0], x_pe[..., 1]
    kc, ks = source_pe[..., 0], source_pe[..., 1]
    Qp = _embed_rotary_ref(q, qc, qs)
    Kp = _embed_rotary_ref(k, kc, ks)
    Vp = _embed_rotary_ref(v, kc, ks)
    Q = Q.reshape(N, L, nhead, D)
    K = K.reshape(N, S, nhead, D)
    Qp = Qp.reshape(N, L, nhead, D)
    Kp = Kp.reshape(N, S, nhead, D)
    Vp = Vp.reshape(N, S, nhead, D)
    values = Vp / S
    KV = jnp.einsum('nshd,nshv->nhdv', Kp, values)
    Z = 1.0 / (jnp.einsum('nlhd,nhd->nlh', Q, K.sum(axis=1)) + ATTN_EPS)
    qv = jnp.einsum('nlhd,nhdv,nlh->nlhv', Qp, KV, Z) * S
    msg = qv.reshape(N, L, C) @ p['wm'].T

    def ln(v_, w, b):
        m = v_.mean(-1, keepdims=True)
        var = ((v_ - m) ** 2).mean(-1, keepdims=True)
        return (v_ - m) / jnp.sqrt(var + LN_EPS) * w + b

    msg = ln(msg, p['ln1w'], p['ln1b'])
    h = jnp.concatenate([x, msg], axis=-1) @ p['w1'].T
    h = jnp.maximum(h, 0.0)
    msg = h @ p['w2'].T
    msg = ln(msg, p['ln2w'], p['ln2b'])
    return x + msg


# ----------------------------------- main ----------------------------------

if __name__ == "__main__":
    key = jax.random.PRNGKey(0)
    # small but lane-dense (C multiple of 128) shapes; real LoFTR uses C=256, nhead=8
    N, L, S, C, NHEAD = 2, 8, 8, 128, 4
    layer_names = ['self', 'cross']

    k_f0, k_f1, k_p0, k_p1, k_params = jax.random.split(key, 5)
    feat0 = jax.random.normal(k_f0, (N, L, C), jnp.float32)
    feat1 = jax.random.normal(k_f1, (N, S, C), jnp.float32)

    def make_pe(k, seq):
        theta = jax.random.uniform(k, (N, seq, C // 2), jnp.float32, 0.0, 2 * np.pi)
        theta = jnp.repeat(theta, 2, axis=-1)                        # pairwise
        return jnp.stack([jnp.cos(theta), jnp.sin(theta)], axis=-1)  # [N, seq, C, 2]

    pe0 = make_pe(k_p0, L)
    pe1 = make_pe(k_p1, S)

    layer_params = [init_layer_params(k, C)
                    for k in jax.random.split(k_params, len(layer_names))]

    out0, out1 = local_feature_transformer(feat0, feat1, pe0, pe1,
                                           layer_params, layer_names, NHEAD)
    out0 = jax.block_until_ready(out0)
    out1 = jax.block_until_ready(out1)

    # pure-JAX reference for the same transformer stack
    r0, r1 = feat0, feat1
    for p, name in zip(layer_params, layer_names):
        if name == 'self':
            r0 = rotary_encoder_layer_ref(r0, r0, pe0, pe0, p, NHEAD)
            r1 = rotary_encoder_layer_ref(r1, r1, pe1, pe1, p, NHEAD)
        else:
            r0 = rotary_encoder_layer_ref(r0, r1, pe0, pe1, p, NHEAD)
            r1 = rotary_encoder_layer_ref(r1, r0, pe1, pe0, p, NHEAD)

    assert np.allclose(np.asarray(out0), np.asarray(r0), rtol=5e-2, atol=5e-2)
    assert np.allclose(np.asarray(out1), np.asarray(r1), rtol=5e-2, atol=5e-2)
    print("KERNEL_OK")
</pallas_src>

<mosaic_0001>
module attributes {stable_mosaic.version = 11 : i64} {
  func.func @_kv_kernel(%arg0: i32, %arg1: i32, %arg2: memref<1x16x128xf32, #tpu.memory_space<vmem>>, %arg3: memref<1x16x128xbf16, #tpu.memory_space<vmem>>, %arg4: memref<1x16x128xbf16, #tpu.memory_space<vmem>>, %arg5: memref<128x128xbf16, #tpu.memory_space<vmem>>, %arg6: memref<128x128xbf16, #tpu.memory_space<vmem>>, %arg7: memref<1x128x128xf32, #tpu.memory_space<vmem>>, %arg8: memref<1x1x128xf32, #tpu.memory_space<vmem>>, %arg9: memref<128x128xf32, #tpu.memory_space<vmem>>, %arg10: memref<1x128xf32, #tpu.memory_space<vmem>>) attributes {dimension_semantics = [#tpu.dimension_semantics<parallel>, #tpu.dimension_semantics<arbitrary>], iteration_bounds = array<i64: 2, 1>, scalar_prefetch = 0 : i64, scratch_operands = 2 : i64, tpu.core_type = #tpu.core_type<tc>, window_params = [{transform_indices = @transform_0, window_bounds = array<i64: 1, 16, 128>}, {transform_indices = @transform_1, window_bounds = array<i64: 1, 16, 128>}, {transform_indices = @transform_2, window_bounds = array<i64: 1, 16, 128>}, {pipeline_mode = #tpu.pipeline_mode<synchronous>, transform_indices = @transform_3, window_bounds = array<i64: 128, 128>}, {pipeline_mode = #tpu.pipeline_mode<synchronous>, transform_indices = @transform_4, window_bounds = array<i64: 128, 128>}, {transform_indices = @transform_5, window_bounds = array<i64: 1, 128, 128>}, {transform_indices = @transform_6, window_bounds = array<i64: 1, 1, 128>}]} {
    %c0_i32 = arith.constant 0 : i32
    %0 = arith.cmpi eq, %arg1, %c0_i32 : i32
    %1 = arith.extui %0 : i1 to i32
    %c0_i32_0 = arith.constant 0 : i32
    %2 = arith.cmpi ne, %1, %c0_i32_0 : i32
    scf.if %2 {
      %cst_35 = arith.constant 0.000000e+00 : f32
      %97 = vector.broadcast %cst_35 : f32 to vector<128x128xf32>
      %c0_36 = arith.constant 0 : index
      %c0_37 = arith.constant 0 : index
      %98 = vector.load %arg9[%c0_36, %c0_37] : memref<128x128xf32, #tpu.memory_space<vmem>>, vector<128x128xf32>
      tpu.vector_store %arg9[%c0_36, %c0_37], %97 {strides = array<i32>} : memref<128x128xf32, #tpu.memory_space<vmem>>, vector<128x128xf32>,
      %cst_38 = arith.constant 0.000000e+00 : f32
      %99 = vector.broadcast %cst_38 : f32 to vector<1x128xf32>
      %c0_39 = arith.constant 0 : index
      %c0_40 = arith.constant 0 : index
      %100 = vector.load %arg10[%c0_39, %c0_40] : memref<1x128xf32, #tpu.memory_space<vmem>>, vector<1x128xf32>
      tpu.vector_store %arg10[%c0_39, %c0_40], %99 {strides = array<i32>} : memref<1x128xf32, #tpu.memory_space<vmem>>, vector<1x128xf32>,
    } else {
    }
    %c0 = arith.constant 0 : index
    %c0_1 = arith.constant 0 : index
    %c0_2 = arith.constant 0 : index
    %3 = vector.load %arg2[%c0, %c0_1, %c0_2] : memref<1x16x128xf32, #tpu.memory_space<vmem>>, vector<1x16x128xf32>
    %4 = vector.shape_cast %3 : vector<1x16x128xf32> to vector<16x128xf32>
    %5 = arith.truncf %4 : vector<16x128xf32> to vector<16x128xbf16>
    %c0_3 = arith.constant 0 : index
    %c0_4 = arith.constant 0 : index
    %6 = vector.load %arg5[%c0_3, %c0_4] : memref<128x128xbf16, #tpu.memory_space<vmem>>, vector<128x128xbf16>
    %cst = arith.constant dense<0.000000e+00> : vector<16x128xf32>
    %7 = tpu.matmul %5, %6, %cst {dimension_numbers = #tpu.dot_dimension_numbers<[1], [0], [0], [1], [0, 0, 1, 1], [], []>} : vector<16x128xbf16>, vector<128x128xbf16>, vector<16x128xf32> -> vector<16x128xf32>
    %c0_5 = arith.constant 0 : index
    %c0_6 = arith.constant 0 : index
    %8 = vector.load %arg6[%c0_5, %c0_6] : memref<128x128xbf16, #tpu.memory_space<vmem>>, vector<128x128xbf16>
    %cst_7 = arith.constant dense<0.000000e+00> : vector<16x128xf32>
    %9 = tpu.matmul %5, %8, %cst_7 {dimension_numbers = #tpu.dot_dimension_numbers<[1], [0], [0], [1], [0, 0, 1, 1], [], []>} : vector<16x128xbf16>, vector<128x128xbf16>, vector<16x128xf32> -> vector<16x128xf32>
    %cst_8 = arith.constant 0.000000e+00 : f32
    %10 = vector.broadcast %cst_8 : f32 to vector<16x128xf32>
    %11 = arith.cmpf ogt, %7, %10 : vector<16x128xf32>
    %cst_9 = arith.constant 0.000000e+00 : f32
    %12 = vector.broadcast %cst_9 : f32 to vector<16x128xf32>
    %13 = arith.minimumf %7, %12 : vector<16x128xf32>
    %14 = math.exp %13 : vector<16x128xf32>
    %cst_10 = arith.constant 1.000000e+00 : f32
    %15 = vector.broadcast %cst_10 : f32 to vector<16x128xf32>
    %16 = arith.subf %14, %15 : vector<16x128xf32>
    %17 = arith.select %11, %7, %16 : vector<16x128xi1>, vector<16x128xf32>
    %cst_11 = arith.constant 1.000000e+00 : f32
    %18 = vector.broadcast %cst_11 : f32 to vector<16x128xf32>
    %19 = arith.addf %17, %18 : vector<16x128xf32>
    %20 = tpu.iota {dimensions = array<i32: 1>} : vector<1x128xi32>
    %c2_i32 = arith.constant 2 : i32
    %c0_i32_12 = arith.constant 0 : i32
    %21 = arith.cmpi eq, %c2_i32, %c0_i32_12 : i32
    %c1_i32 = arith.constant 1 : i32
    %22 = arith.select %21, %c1_i32, %c2_i32 : i32
    %23 = vector.broadcast %22 : i32 to vector<1x128xi32>
    %24 = arith.remsi %20, %23 : vector<1x128xi32>
    %c0_i32_13 = arith.constant 0 : i32
    %25 = vector.broadcast %c0_i32_13 : i32 to vector<1x128xi32>
    %26 = arith.cmpi ne, %24, %25 : vector<1x128xi32>
    %c0_i32_14 = arith.constant 0 : i32
    %27 = vector.broadcast %c0_i32_14 : i32 to vector<1x128xi32>
    %28 = arith.cmpi slt, %24, %27 : vector<1x128xi32>
    %c0_i32_15 = arith.constant 0 : i32
    %29 = arith.cmpi slt, %22, %c0_i32_15 : i32
    %30 = vector.broadcast %29 : i1 to vector<1x128xi1>
    %31 = vector.broadcast %30 : vector<1x128xi1> to vector<1x128xi1>
    %32 = arith.xori %28, %31 : vector<1x128xi1>
    %33 = arith.andi %32, %26 : vector<1x128xi1>
    %34 = vector.broadcast %22 : i32 to vector<1x128xi32>
    %35 = arith.addi %24, %34 : vector<1x128xi32>
    %36 = arith.select %33, %35, %24 : vector<1x128xi1>, vector<1x128xi32>
    %c0_i32_16 = arith.constant 0 : i32
    %37 = vector.broadcast %c0_i32_16 : i32 to vector<1x128xi32>
    %38 = arith.cmpi eq, %36, %37 : vector<1x128xi32>
    %c0_17 = arith.constant 0 : index
    %c0_18 = arith.constant 0 : index
    %c0_19 = arith.constant 0 : index
    %39 = vector.load %arg3[%c0_17, %c0_18, %c0_19] : memref<1x16x128xbf16, #tpu.memory_space<vmem>>, vector<1x16x128xbf16>
    %40 = vector.shape_cast %39 : vector<1x16x128xbf16> to vector<16x128xbf16>
    %c0_20 = arith.constant 0 : index
    %c0_21 = arith.constant 0 : index
    %c0_22 = arith.constant 0 : index
    %41 = vector.load %arg4[%c0_20, %c0_21, %c0_22] : memref<1x16x128xbf16, #tpu.memory_space<vmem>>, vector<1x16x128xbf16>
    %42 = vector.shape_cast %41 : vector<1x16x128xbf16> to vector<16x128xbf16>
    %43 = arith.extf %40 : vector<16x128xbf16> to vector<16x128xf32>
    %44 = arith.mulf %7, %43 : vector<16x128xf32>
    %45 = vector.extract_strided_slice %7 {offsets = [0, 1], sizes = [16, 127], strides = [1, 1]} : vector<16x128xf32> to vector<16x127xf32>
    %46 = vector.extract_strided_slice %7 {offsets = [0, 0], sizes = [16, 1], strides = [1, 1]} : vector<16x128xf32> to vector<16x1xf32>
    %47 = tpu.concatenate %45, %46 in 1 : vector<16x127xf32>, vector<16x1xf32> -> vector<16x128xf32>
    %48 = vector.extract_strided_slice %7 {offsets = [0, 127], sizes = [16, 1], strides = [1, 1]} : vector<16x128xf32> to vector<16x1xf32>
    %49 = vector.extract_strided_slice %7 {offsets = [0, 0], sizes = [16, 127], strides = [1, 1]} : vector<16x128xf32> to vector<16x127xf32>
    %50 = tpu.concatenate %48, %49 in 1 : vector<16x1xf32>, vector<16x127xf32> -> vector<16x128xf32>
    %51 = vector.shape_cast %38 : vector<1x128xi1> to vector<1x128xi1>
    %52 = vector.broadcast %51 : vector<1x128xi1> to vector<16x128xi1>
    %53 = arith.select %52, %47, %50 : vector<16x128xi1>, vector<16x128xf32>
    %54 = arith.extf %42 : vector<16x128xbf16> to vector<16x128xf32>
    %55 = arith.mulf %53, %54 : vector<16x128xf32>
    %56 = arith.addf %44, %55 : vector<16x128xf32>
    %57 = arith.extf %40 : vector<16x128xbf16> to vector<16x128xf32>
    %58 = arith.mulf %9, %57 : vector<16x128xf32>
    %59 = vector.extract_strided_slice %9 {offsets = [0, 1], sizes = [16, 127], strides = [1, 1]} : vector<16x128xf32> to vector<16x127xf32>
    %60 = vector.extract_strided_slice %9 {offsets = [0, 0], sizes = [16, 1], strides = [1, 1]} : vector<16x128xf32> to vector<16x1xf32>
    %61 = tpu.concatenate %59, %60 in 1 : vector<16x127xf32>, vector<16x1xf32> -> vector<16x128xf32>
    %62 = vector.extract_strided_slice %9 {offsets = [0, 127], sizes = [16, 1], strides = [1, 1]} : vector<16x128xf32> to vector<16x1xf32>
    %63 = vector.extract_strided_slice %9 {offsets = [0, 0], sizes = [16, 127], strides = [1, 1]} : vector<16x128xf32> to vector<16x127xf32>
    %64 = tpu.concatenate %62, %63 in 1 : vector<16x1xf32>, vector<16x127xf32> -> vector<16x128xf32>
    %65 = vector.shape_cast %38 : vector<1x128xi1> to vector<1x128xi1>
    %66 = vector.broadcast %65 : vector<1x128xi1> to vector<16x128xi1>
    %67 = arith.select %66, %61, %64 : vector<16x128xi1>, vector<16x128xf32>
    %68 = arith.extf %42 : vector<16x128xbf16> to vector<16x128xf32>
    %69 = arith.mulf %67, %68 : vector<16x128xf32>
    %70 = arith.addf %58, %69 : vector<16x128xf32>
    %c16_i32 = arith.constant 16 : i32
    %71 = arith.muli %arg1, %c16_i32 : i32
    %72 = tpu.iota {dimensions = array<i32: 0>} : vector<16x1xi32>
    %73 = vector.broadcast %71 : i32 to vector<16x1xi32>
    %74 = arith.addi %73, %72 : vector<16x1xi32>
    %c8_i32 = arith.constant 8 : i32
    %75 = vector.broadcast %c8_i32 : i32 to vector<16x1xi32>
    %76 = arith.cmpi slt, %74, %75 : vector<16x1xi32>
    %77 = arith.extui %76 : vector<16x1xi1> to vector<16x1xi32>
    %78 = arith.sitofp %77 : vector<16x1xi32> to vector<16x1xf32>
    %79 = vector.broadcast %78 : vector<16x1xf32> to vector<16x128xf32>
    %80 = arith.mulf %19, %79 : vector<16x128xf32>
    %81 = vector.broadcast %78 : vector<16x1xf32> to vector<16x128xf32>
    %82 = arith.mulf %56, %81 : vector<16x128xf32>
    %c0_23 = arith.constant 0 : index
    %c0_24 = arith.constant 0 : index
    %83 = vector.load %arg10[%c0_23, %c0_24] : memref<1x128xf32, #tpu.memory_space<vmem>>, vector<1x128xf32>
    %cst_25 = arith.constant dense<0.000000e+00> : vector<128xf32>
    %84 = vector.multi_reduction <add>, %80, %cst_25 [0] : vector<16x128xf32> to vector<128xf32>
    %85 = vector.shape_cast %84 : vector<128xf32> to vector<1x128xf32>
    %86 = arith.addf %83, %85 : vector<1x128xf32>
    %c0_26 = arith.constant 0 : index
    %c0_27 = arith.constant 0 : index
    %87 = vector.load %arg10[%c0_26, %c0_27] : memref<1x128xf32, #tpu.memory_space<vmem>>, vector<1x128xf32>
    tpu.vector_store %arg10[%c0_26, %c0_27], %86 {strides = array<i32>} : memref<1x128xf32, #tpu.memory_space<vmem>>, vector<1x128xf32>,
    %c0_28 = arith.constant 0 : index
    %c0_29 = arith.constant 0 : index
    %88 = vector.load %arg9[%c0_28, %c0_29] : memref<128x128xf32, #tpu.memory_space<vmem>>, vector<128x128xf32>
    %89 = arith.truncf %82 : vector<16x128xf32> to vector<16x128xbf16>
    %90 = arith.truncf %70 : vector<16x128xf32> to vector<16x128xbf16>
    %cst_30 = arith.constant dense<0.000000e+00> : vector<128x128xf32>
    %91 = tpu.matmul %89, %90, %cst_30 {dimension_numbers = #tpu.dot_dimension_numbers<[0], [0], [1], [1], [0, 1, 1, 1], [], []>} : vector<16x128xbf16>, vector<16x128xbf16>, vector<128x128xf32> -> vector<128x128xf32>
    %92 = arith.addf %88, %91 : vector<128x128xf32>
    %c0_31 = arith.constant 0 : index
    %c0_32 = arith.constant 0 : index
    %93 = vector.load %arg9[%c0_31, %c0_32] : memref<128x128xf32, #tpu.memory_space<vmem>>, vector<128x128xf32>
    tpu.vector_store %arg9[%c0_31, %c0_32], %92 {strides = array<i32>} : memref<128x128xf32, #tpu.memory_space<vmem>>, vector<128x128xf32>,
    %c0_i32_33 = arith.constant 0 : i32
    %94 = arith.cmpi eq, %arg1, %c0_i32_33 : i32
    %95 = arith.extui %94 : i1 to i32
    %c0_i32_34 = arith.constant 0 : i32
    %96 = arith.cmpi ne, %95, %c0_i32_34 : i32
    scf.if %96 {
      %c0_35 = arith.constant 0 : index
      %c0_36 = arith.constant 0 : index
      %97 = vector.load %arg9[%c0_35, %c0_36] : memref<128x128xf32, #tpu.memory_space<vmem>>, vector<128x128xf32>
      %c0_37 = arith.constant 0 : index
      %c0_38 = arith.constant 0 : index
      %c0_39 = arith.constant 0 : index
      %98 = vector.load %arg7[%c0_37, %c0_38, %c0_39] : memref<1x128x128xf32, #tpu.memory_space<vmem>>, vector<1x128x128xf32>
      %99 = vector.shape_cast %98 : vector<1x128x128xf32> to vector<128x128xf32>
      %100 = vector.shape_cast %97 : vector<128x128xf32> to vector<1x128x128xf32>
      tpu.vector_store %arg7[%c0_37, %c0_38, %c0_39], %100 {strides = array<i32>} : memref<1x128x128xf32, #tpu.memory_space<vmem>>, vector<1x128x128xf32>,
      %c0_40 = arith.constant 0 : index
      %c0_41 = arith.constant 0 : index
      %101 = vector.load %arg10[%c0_40, %c0_41] : memref<1x128xf32, #tpu.memory_space<vmem>>, vector<1x128xf32>
      %c0_42 = arith.constant 0 : index
      %c0_43 = arith.constant 0 : index
      %c0_44 = arith.constant 0 : index
      %102 = vector.load %arg8[%c0_42, %c0_43, %c0_44] : memref<1x1x128xf32, #tpu.memory_space<vmem>>, vector<1x1x128xf32>
      %103 = vector.shape_cast %102 : vector<1x1x128xf32> to vector<1x128xf32>
      %104 = vector.shape_cast %101 : vector<1x128xf32> to vector<1x1x128xf32>
      tpu.vector_store %arg8[%c0_42, %c0_43, %c0_44], %104 {strides = array<i32>} : memref<1x1x128xf32, #tpu.memory_space<vmem>>, vector<1x1x128xf32>,
    } else {
    }
    return
  }
  func.func @transform_0(%arg0: i32, %arg1: i32) -> (i32, i32, i32) {
    %c0_i32 = arith.constant 0 : i32
    %c0_i32_0 = arith.constant 0 : i32
    return %arg0, %arg1, %c0_i32 : i32, i32, i32
  }
  func.func @transform_1(%arg0: i32, %arg1: i32) -> (i32, i32, i32) {
    %c0_i32 = arith.constant 0 : i32
    %c0_i32_0 = arith.constant 0 : i32
    return %arg0, %arg1, %c0_i32 : i32, i32, i32
  }
  func.func @transform_2(%arg0: i32, %arg1: i32) -> (i32, i32, i32) {
    %c0_i32 = arith.constant 0 : i32
    %c0_i32_0 = arith.constant 0 : i32
    return %arg0, %arg1, %c0_i32 : i32, i32, i32
  }
  func.func @transform_3(%arg0: i32, %arg1: i32) -> (i32, i32) {
    %c0_i32 = arith.constant 0 : i32
    %c0_i32_0 = arith.constant 0 : i32
    %c0_i32_1 = arith.constant 0 : i32
    return %c0_i32, %c0_i32_0 : i32, i32
  }
  func.func @transform_4(%arg0: i32, %arg1: i32) -> (i32, i32) {
    %c0_i32 = arith.constant 0 : i32
    %c0_i32_0 = arith.constant 0 : i32
    %c0_i32_1 = arith.constant 0 : i32
    return %c0_i32, %c0_i32_0 : i32, i32
  }
  func.func @transform_5(%arg0: i32, %arg1: i32) -> (i32, i32, i32) {
    %c0_i32 = arith.constant 0 : i32
    %c0_i32_0 = arith.constant 0 : i32
    %c0_i32_1 = arith.constant 0 : i32
    return %arg0, %c0_i32, %c0_i32_0 : i32, i32, i32
  }
  func.func @transform_6(%arg0: i32, %arg1: i32) -> (i32, i32, i32) {
    %c0_i32 = arith.constant 0 : i32
    %c0_i32_0 = arith.constant 0 : i32
    %c0_i32_1 = arith.constant 0 : i32
    return %arg0, %c0_i32, %c0_i32_0 : i32, i32, i32
  }
}

</mosaic_0001>

<llo_original>
// kernel: tpu_custom_call.1
$region0: #{tpu_custom_call.1}
  #allocation0 [shape = 'u32[]', space=smem, size = 0x4, offset = 0x4, fixed_abs, tag = 'smem constant byte address 0x4 - core index']
  #allocation1 [shape = 'u32[144,128]{1,0:T(1,128)}', space=vmem, size = 0x12000, scoped, tag = 'internal scratch']
  #allocation2 [shape = 'f32[128,128]{1,0:T(8,128)}', space=vmem, size = 0x10000, scoped, tag = 'scratch operand']
  #allocation3 [shape = 'f32[1,128]{1,0:T(1,128)}', space=vmem, size = 0x200, scoped, tag = 'scratch operand']
  %s0 = inlined_call_operand.hbm [shape: f32[2,16,128], index: 0, kind: input, shape index: {}]
  %s1 = inlined_call_operand.hbm [shape: bf16[2,16,128], index: 1, kind: input, shape index: {}]
  %s2 = inlined_call_operand.hbm [shape: bf16[2,16,128], index: 2, kind: input, shape index: {}]
  %s3 = inlined_call_operand.hbm [shape: bf16[128,128], index: 3, kind: input, shape index: {}]
  %s4 = inlined_call_operand.hbm [shape: bf16[128,128], index: 4, kind: input, shape index: {}]
  %s5 = inlined_call_operand.hbm [shape: f32[2,128,128], index: 5, kind: output, shape index: {0}]
  %s6 = inlined_call_operand.hbm [shape: f32[2,1,128], index: 6, kind: output, shape index: {1}]
  %7 = xla_tuple %s5, %s6
  %s8 = sld [smem:[#allocation0]]
  $region89: #{tpu_custom_call.1} parent=0
    _
  %s10 = ssub.s32 1, %s8
  %s11 = scalar_select 0, %s10, %s8
  $region1: #{tpu_custom_call.1} parent=0
    #allocation4 [shape = 'u8[16384]{0}', space=vmem, size = 0x4000, scoped, tag = 'input window, operand 0']
    #allocation5 [shape = 's32[2]{0}', space=sflag, size = 0x8, scoped, tag = 'scoped memory for tpu_custom_call.1']
    #allocation6 [shape = 's32[2]{0}', space=sflag, size = 0x8, scoped, tag = 'scoped memory for tpu_custom_call.1']
    #allocation7 [shape = 'u8[8192]{0}', space=vmem, size = 0x2000, scoped, tag = 'input window, operand 1']
    #allocation8 [shape = 's32[2]{0}', space=sflag, size = 0x8, scoped, tag = 'scoped memory for tpu_custom_call.1']
    #allocation9 [shape = 'u8[8192]{0}', space=vmem, size = 0x2000, scoped, tag = 'input window, operand 2']
    #allocation10 [shape = 'u8[32768]{0}', space=vmem, size = 0x8000, scoped, tag = 'input window, operand 3, single buffered']
    #allocation11 [shape = 's32[1]{0}', space=sflag, size = 0x4, scoped, tag = 'scoped memory for tpu_custom_call.1']
    #allocation12 [shape = 'u8[32768]{0}', space=vmem, size = 0x8000, scoped, tag = 'input window, operand 4, single buffered']
    #allocation13 [shape = 'u8[131072]{0}', space=vmem, size = 0x20000, scoped, tag = 'output window, operand 0']
    #allocation14 [shape = 'u8[1024]{0}', space=vmem, size = 0x400, scoped, tag = 'output window, operand 1']
    #allocation15 [shape = 's32[2]{0}', space=sflag, size = 0x8, scoped, tag = 'scoped memory for tpu_custom_call.1']
    %12 = vsyncpa [#allocation5], 0
    %s13 = scalar_lea.sflag [#allocation5], 1
    %14 = vsyncpa %s13, 0
    %15 = vsyncpa [#allocation8], 0
    %s16 = scalar_lea.sflag [#allocation8], 1
    %17 = vsyncpa %s16, 0
    %18 = vsyncpa [#allocation11], 0
    %19 = vsyncpa [#allocation6], 0
    %s20 = scalar_lea.sflag [#allocation6], 1
    %21 = vsyncpa %s20, 0
    %22 = vsyncpa [#allocation15], 0
    %s23 = scalar_lea.sflag [#allocation15], 1
    %24 = vsyncpa %s23, 0
    loop: start=0, step=1, limit=4
    $region2: #{tpu_custom_call.1} parent=1 // loop_pre_header
      _
    $region3: #{tpu_custom_call.1} parent=1 // loop_header
      %s26 = sphi 0, %s30
      %p27 = scmp.ge.s32.totalorder %s26, 4
      %s33 = sphi 0, %s45
      %s34 = sphi 0, %s41
      %s35 = sphi 0, %s33
      %s36 = sphi 0, %s34
      %s37 = sphi 0, %s35
      %s38 = sphi 0, %s36
      %s50 = sphi 0, %s52
      %s53 = sphi 0, %s50
      %s54 = sphi 0, %s53
      %s70 = sphi 0, %s54
      %s78 = sphi 0, %s80
      %s81 = sphi 0, %s78
      %s82 = sphi 0, %s81
      %s98 = sphi 0, %s82
      %s106 = sphi 0, %s108
      %s109 = sphi 0, %s106
      %s110 = sphi 0, %s109
      %s126 = sphi 0, %s110
      %s130 = sphi 0, %s130
      %s132 = sphi 0, %s130
      %s133 = sphi 0, %s132
      %s147 = sphi 0, %s133
      %s151 = sphi 0, %s151
      %s153 = sphi 0, %s151
      %s154 = sphi 0, %s153
      %s168 = sphi 0, %s154
      %s174 = sphi 0, %s176
      %s177 = sphi 0, %s174
      %s178 = sphi 0, %s177
      %s194 = sphi 0, %s178
      %s200 = sphi 0, %s202
      %s203 = sphi 0, %s200
      %s204 = sphi 0, %s203
      %s220 = sphi 0, %s204
    $region4: #{tpu_custom_call.1} parent=1 // loop_header_branch
      %29 = sbr.rel (%p27) target = $region8
    $region5: #{tpu_custom_call.1} parent=1 // loop_body
      %s31 = ssub.s32 %s26, 1
      %s32 = ssub.s32 %s26, 2
      %s39 = sadd.s32 1, %s34
      %p40 = scmp.ge.s32.totalorder %s39, 1
      %s41 = scalar_select %p40, 0, %s39
      %s42 = sadd.s32 1, %s33
      %s43 = scalar_select %p40, %s42, %s33
      %p44 = scmp.ge.s32.totalorder %s43, 2
      %s45 = scalar_select %p44, 0, %s43
      %s46 = ssub.s32 %s33, %s45
      %s47 = ssub.s32 %s34, %s41
      %s48 = sor.u32 %s46, %s47
      %p49 = scmp.eq.s32.totalorder %s48, 0
      %s51 = sadd.s32 %s50, 1
      %s52 = scalar_select %p49, %s50, %s51
      %p55 = pneg %p49
      %p56 = scmp.eq.s32.totalorder %s26, 1
      %p57 = por %p55, %p56
      %p58 = scmp.ne.s32.totalorder %s50, %s53
      %p59 = scmp.eq.s32.totalorder %s26, 0
      %p60 = por %p58, %p59
      %p61 = scmp.ne.s32.totalorder %s50, %s53
      %p62 = scmp.eq.s32.totalorder %s31, 1
      %p63 = por %p61, %p62
      %p64 = scmp.ne.s32.totalorder %s53, %s54
      %p65 = scmp.eq.s32.totalorder %s31, 0
      %p66 = por %p64, %p65
      %p67 = scmp.ne.s32.totalorder %s53, %s54
      %p68 = scmp.eq.s32.totalorder %s32, 1
      %p69 = por %p67, %p68
      %p71 = scmp.ne.s32.totalorder %s54, %s70
      %p72 = scmp.eq.s32.totalorder %s32, 0
      %p73 = por %p71, %p72
      %s74 = ssub.s32 %s33, %s45
      %s75 = ssub.s32 %s34, %s41
      %s76 = sor.u32 %s74, %s75
      %p77 = scmp.eq.s32.totalorder %s76, 0
      %s79 = sadd.s32 %s78, 1
      %s80 = scalar_select %p77, %s78, %s79
      %p83 = pneg %p77
      %p84 = scmp.eq.s32.totalorder %s26, 1
      %p85 = por %p83, %p84
      %p86 = scmp.ne.s32.totalorder %s78, %s81
      %p87 = scmp.eq.s32.totalorder %s26, 0
      %p88 = por %p86, %p87
      %p89 = scmp.ne.s32.totalorder %s78, %s81
      %p90 = scmp.eq.s32.totalorder %s31, 1
      %p91 = por %p89, %p90
      %p92 = scmp.ne.s32.totalorder %s81, %s82
      %p93 = scmp.eq.s32.totalorder %s31, 0
      %p94 = por %p92, %p93
      %p95 = scmp.ne.s32.totalorder %s81, %s82
      %p96 = scmp.eq.s32.totalorder %s32, 1
      %p97 = por %p95, %p96
      %p99 = scmp.ne.s32.totalorder %s82, %s98
      %p100 = scmp.eq.s32.totalorder %s32, 0
      %p101 = por %p99, %p100
      %s102 = ssub.s32 %s33, %s45
      %s103 = ssub.s32 %s34, %s41
      %s104 = sor.u32 %s102, %s103
      %p105 = scmp.eq.s32.totalorder %s104, 0
      %s107 = sadd.s32 %s106, 1
      %s108 = scalar_select %p105, %s106, %s107
      %p111 = pneg %p105
      %p112 = scmp.eq.s32.totalorder %s26, 1
      %p113 = por %p111, %p112
      %p114 = scmp.ne.s32.totalorder %s106, %s109
      %p115 = scmp.eq.s32.totalorder %s26, 0
      %p116 = por %p114, %p115
      %p117 = scmp.ne.s32.totalorder %s106, %s109
      %p118 = scmp.eq.s32.totalorder %s31, 1
      %p119 = por %p117, %p118
      %p120 = scmp.ne.s32.totalorder %s109, %s110
      %p121 = scmp.eq.s32.totalorder %s31, 0
      %p122 = por %p120, %p121
      %p123 = scmp.ne.s32.totalorder %s109, %s110
      %p124 = scmp.eq.s32.totalorder %s32, 1
      %p125 = por %p123, %p124
      %p127 = scmp.ne.s32.totalorder %s110, %s126
      %p128 = scmp.eq.s32.totalorder %s32, 0
      %p129 = por %p127, %p128
      %s131 = sadd.s32 %s130, 1
      %p134 = scmp.eq.s32.totalorder %s26, 1
      %p135 = scmp.ne.s32.totalorder %s130, %s132
      %p136 = scmp.eq.s32.totalorder %s26, 0
      %p137 = por %p135, %p136
      %p138 = scmp.ne.s32.totalorder %s130, %s132
      %p139 = scmp.eq.s32.totalorder %s31, 1
      %p140 = por %p138, %p139
      %p141 = scmp.ne.s32.totalorder %s132, %s133
      %p142 = scmp.eq.s32.totalorder %s31, 0
      %p143 = por %p141, %p142
      %p144 = scmp.ne.s32.totalorder %s132, %s133
      %p145 = scmp.eq.s32.totalorder %s32, 1
      %p146 = por %p144, %p145
      %p148 = scmp.ne.s32.totalorder %s133, %s147
      %p149 = scmp.eq.s32.totalorder %s32, 0
      %p150 = por %p148, %p149
      %s152 = sadd.s32 %s151, 1
      %p155 = scmp.eq.s32.totalorder %s26, 1
      %p156 = scmp.ne.s32.totalorder %s151, %s153
      %p157 = scmp.eq.s32.totalorder %s26, 0
      %p158 = por %p156, %p157
      %p159 = scmp.ne.s32.totalorder %s151, %s153
      %p160 = scmp.eq.s32.totalorder %s31, 1
      %p161 = por %p159, %p160
      %p162 = scmp.ne.s32.totalorder %s153, %s154
      %p163 = scmp.eq.s32.totalorder %s31, 0
      %p164 = por %p162, %p163
      %p165 = scmp.ne.s32.totalorder %s153, %s154
      %p166 = scmp.eq.s32.totalorder %s32, 1
      %p167 = por %p165, %p166
      %p169 = scmp.ne.s32.totalorder %s154, %s168
      %p170 = scmp.eq.s32.totalorder %s32, 0
      %p171 = por %p169, %p170
      %s172 = ssub.s32 %s33, %s45
      %p173 = scmp.eq.s32.totalorder %s172, 0
      %s175 = sadd.s32 %s174, 1
      %s176 = scalar_select %p173, %s174, %s175
      %p179 = pneg %p173
      %p180 = scmp.eq.s32.totalorder %s26, 1
      %p181 = por %p179, %p180
      %p182 = scmp.ne.s32.totalorder %s174, %s177
      %p183 = scmp.eq.s32.totalorder %s26, 0
      %p184 = por %p182, %p183
      %p185 = scmp.ne.s32.totalorder %s174, %s177
      %p186 = scmp.eq.s32.totalorder %s31, 1
      %p187 = por %p185, %p186
      %p188 = scmp.ne.s32.totalorder %s177, %s178
      %p189 = scmp.eq.s32.totalorder %s31, 0
      %p190 = por %p188, %p189
      %p191 = scmp.ne.s32.totalorder %s177, %s178
      %p192 = scmp.eq.s32.totalorder %s32, 1
      %p193 = por %p191, %p192
      %p195 = scmp.ne.s32.totalorder %s178, %s194
      %p196 = scmp.eq.s32.totalorder %s32, 0
      %p197 = por %p195, %p196
      %s198 = ssub.s32 %s33, %s45
      %p199 = scmp.eq.s32.totalorder %s198, 0
      %s201 = sadd.s32 %s200, 1
      %s202 = scalar_select %p199, %s200, %s201
      %p205 = pneg %p199
      %p206 = scmp.eq.s32.totalorder %s26, 1
      %p207 = por %p205, %p206
      %p208 = scmp.ne.s32.totalorder %s200, %s203
      %p209 = scmp.eq.s32.totalorder %s26, 0
      %p210 = por %p208, %p209
      %p211 = scmp.ne.s32.totalorder %s200, %s203
      %p212 = scmp.eq.s32.totalorder %s31, 1
      %p213 = por %p211, %p212
      %p214 = scmp.ne.s32.totalorder %s203, %s204
      %p215 = scmp.eq.s32.totalorder %s31, 0
      %p216 = por %p214, %p215
      %p217 = scmp.ne.s32.totalorder %s203, %s204
      %p218 = scmp.eq.s32.totalorder %s32, 1
      %p219 = por %p217, %p218
      %p221 = scmp.ne.s32.totalorder %s204, %s220
      %p222 = scmp.eq.s32.totalorder %s32, 0
      %p223 = por %p221, %p222
      %p224 = scmp.le.s32.totalorder 1, %s26
      %p225 = scmp.lt.s32.totalorder %s26, 3
      %p226 = pnand %p224, %p225
      %p227 = pneg %p226
      // Predicated region
      $region9: #{tpu_custom_call.1} parent=5 // pred_check
        _
      $region10: #{tpu_custom_call.1} parent=5 // pred_check_branch
        %229 = sbr.rel (%p226) target = $region12
      $region11: #{tpu_custom_call.1} parent=5 // pred_region
        %s230 = ssub.s32 %s26, 1
        // Predicated region
        $region13: #{tpu_custom_call.1} parent=11 // pred_check
          %p231 = pneg %p143
        $region14: #{tpu_custom_call.1} parent=11 // pred_check_branch
          %233 = sbr.rel (%p231) target = $region16
        $region15: #{tpu_custom_call.1} parent=11 // pred_region
          %s235 = ssub.s32 1024, 1024
          %236 = vsyncadd [#allocation11], %s235
          %s237 = sshll.u32 [#allocation10], 4
          %s238 = int_to_ptr.vmem [resolvable:$true] %s237
          %243 = dma.hbm_to_vmem [thread:$0]  %s3, 1024, %s238, [#allocation11], 64, 64, 4
        $region16: #{tpu_custom_call.1} parent=11 // pred_fallthru
          _
        // Predicated region
        $region17: #{tpu_custom_call.1} parent=11 // pred_check
          %p244 = pneg %p164
        $region18: #{tpu_custom_call.1} parent=11 // pred_check_branch
          %246 = sbr.rel (%p244) target = $region20
        $region19: #{tpu_custom_call.1} parent=11 // pred_region
          %s248 = ssub.s32 1024, 1024
          %249 = vsyncadd [#allocation11], %s248
          %s250 = sshll.u32 [#allocation12], 4
          %s251 = int_to_ptr.vmem [resolvable:$true] %s250
          %256 = dma.hbm_to_vmem [thread:$0]  %s4, 1024, %s251, [#allocation11], 64, 64, 4
        $region20: #{tpu_custom_call.1} parent=11 // pred_fallthru
          _
      $region12: #{tpu_custom_call.1} parent=5 // pred_fallthru
        _
      %p257 = scmp.lt.s32.totalorder %s26, 2
      // Predicated region
      $region21: #{tpu_custom_call.1} parent=5 // pred_check
        %p258 = pneg %p257
      $region22: #{tpu_custom_call.1} parent=5 // pred_check_branch
        %260 = sbr.rel (%p258) target = $region24
      $region23: #{tpu_custom_call.1} parent=5 // pred_region
        // Predicated region
        $region25: #{tpu_custom_call.1} parent=23 // pred_check
          %p261 = pneg %p60
        $region26: #{tpu_custom_call.1} parent=23 // pred_check_branch
          %263 = sbr.rel (%p261) target = $region28
        $region27: #{tpu_custom_call.1} parent=23 // pred_region
          %s264 = sand.u32 %s50, 1
          %s265 = scalar_lea.sflag [#allocation5], %s264
          %s266 = sand.u32 %s50, 1
          %s267 = smul.addr %s266, 16
          %s268 = scalar_lea.vmem [#allocation4], %s267
          %s269 = smul.u32 2, %s34
          %s271 = ssub.s32 256, 256
          %272 = vsyncadd %s265, %s271
          %s273 = smul.addr %s33, 2
          %s274 = sadd.s32 %s269, %s273
          %s275 = smul.addr %s274, 128
          %s276 = scalar_lea.hbm %s0, %s275
          %s277 = sshll.u32 %s268, 4
          %s278 = int_to_ptr.vmem [resolvable:$true] %s277
          %283 = dma.hbm_to_vmem [thread:$0]  %s276, 256, %s278, %s265, 128, 128, 8
        $region28: #{tpu_custom_call.1} parent=23 // pred_fallthru
          _
        // Predicated region
        $region29: #{tpu_custom_call.1} parent=23 // pred_check
          %p284 = pneg %p88
        $region30: #{tpu_custom_call.1} parent=23 // pred_check_branch
          %286 = sbr.rel (%p284) target = $region32
        $region31: #{tpu_custom_call.1} parent=23 // pred_region
          %s287 = sand.u32 %s26, 1
          %s288 = scalar_lea.sflag [#allocation8], %s287
          %s289 = sand.u32 %s78, 1
          %s290 = smul.addr %s289, 8
          %s291 = scalar_lea.vmem [#allocation7], %s290
          %s292 = smul.u32 2, %s34
          %s294 = ssub.s32 128, 128
          %295 = vsyncadd %s288, %s294
          %s296 = smul.addr %s33, 2
          %s297 = sadd.s32 %s292, %s296
          %s298 = smul.addr %s297, 64
          %s299 = scalar_lea.hbm %s1, %s298
          %s300 = sshll.u32 %s291, 4
          %s301 = int_to_ptr.vmem [resolvable:$true] %s300
          %306 = dma.hbm_to_vmem [thread:$0]  %s299, 128, %s301, %s288, 64, 64, 4
        $region32: #{tpu_custom_call.1} parent=23 // pred_fallthru
          _
        // Predicated region
        $region33: #{tpu_custom_call.1} parent=23 // pred_check
          %p307 = pneg %p116
        $region34: #{tpu_custom_call.1} parent=23 // pred_check_branch
          %309 = sbr.rel (%p307) target = $region36
        $region35: #{tpu_custom_call.1} parent=23 // pred_region
          %s310 = sand.u32 %s26, 1
          %s311 = scalar_lea.sflag [#allocation8], %s310
          %s312 = sand.u32 %s106, 1
          %s313 = smul.addr %s312, 8
          %s314 = scalar_lea.vmem [#allocation9], %s313
          %s315 = smul.u32 2, %s34
          %s317 = ssub.s32 128, 128
          %318 = vsyncadd %s311, %s317
          %s319 = smul.addr %s33, 2
          %s320 = sadd.s32 %s315, %s319
          %s321 = smul.addr %s320, 64
          %s322 = scalar_lea.hbm %s2, %s321
          %s323 = sshll.u32 %s314, 4
          %s324 = int_to_ptr.vmem [resolvable:$true] %s323
          %329 = dma.hbm_to_vmem [thread:$0]  %s322, 128, %s324, %s311, 64, 64, 4
        $region36: #{tpu_custom_call.1} parent=23 // pred_fallthru
          _
      $region24: #{tpu_custom_call.1} parent=5 // pred_fallthru
        _
      %p330 = scmp.le.s32.totalorder 1, %s26
      %p331 = scmp.lt.s32.totalorder %s26, 3
      %p332 = pnand %p330, %p331
      %p333 = pneg %p332
      // Predicated region
      $region37: #{tpu_custom_call.1} parent=5 // pred_check
        _
      $region38: #{tpu_custom_call.1} parent=5 // pred_check_branch
        %335 = sbr.rel (%p332) target = $region40
      $region39: #{tpu_custom_call.1} parent=5 // pred_region
        %s336 = ssub.s32 %s26, 1
        %s337 = sand.u32 %s53, 1
        %s338 = scalar_lea.sflag [#allocation5], %s337
        %s339 = sand.u32 %s53, 1
        %s340 = smul.addr %s339, 16
        %s341 = scalar_lea.vmem [#allocation4], %s340
        // Predicated region
        $region41: #{tpu_custom_call.1} parent=39 // pred_check
          %p342 = pneg %p66
        $region42: #{tpu_custom_call.1} parent=39 // pred_check_branch
          %344 = sbr.rel (%p342) target = $region44
        $region43: #{tpu_custom_call.1} parent=39 // pred_region
          %345 = dma.done %s338, 256
        $region44: #{tpu_custom_call.1} parent=39 // pred_fallthru
          _
        %s346 = sand.u32 %s31, 1
        %s347 = scalar_lea.sflag [#allocation8], %s346
        %s348 = sand.u32 %s81, 1
        %s349 = smul.addr %s348, 8
        %s350 = scalar_lea.vmem [#allocation7], %s349
        // Predicated region
        $region45: #{tpu_custom_call.1} parent=39 // pred_check
          %p351 = pneg %p94
        $region46: #{tpu_custom_call.1} parent=39 // pred_check_branch
          %353 = sbr.rel (%p351) target = $region48
        $region47: #{tpu_custom_call.1} parent=39 // pred_region
          %354 = dma.done %s347, 128
        $region48: #{tpu_custom_call.1} parent=39 // pred_fallthru
          _
        %s355 = sand.u32 %s31, 1
        %s356 = scalar_lea.sflag [#allocation8], %s355
        %s357 = sand.u32 %s109, 1
        %s358 = smul.addr %s357, 8
        %s359 = scalar_lea.vmem [#allocation9], %s358
        // Predicated region
        $region49: #{tpu_custom_call.1} parent=39 // pred_check
          %p360 = pneg %p122
        $region50: #{tpu_custom_call.1} parent=39 // pred_check_branch
          %362 = sbr.rel (%p360) target = $region52
        $region51: #{tpu_custom_call.1} parent=39 // pred_region
          %363 = dma.done %s356, 128
        $region52: #{tpu_custom_call.1} parent=39 // pred_fallthru
          _
        // Predicated region
        $region53: #{tpu_custom_call.1} parent=39 // pred_check
          %p364 = pneg %p143
        $region54: #{tpu_custom_call.1} parent=39 // pred_check_branch
          %366 = sbr.rel (%p364) target = $region56
        $region55: #{tpu_custom_call.1} parent=39 // pred_region
          %367 = dma.done [#allocation11], 1024
        $region56: #{tpu_custom_call.1} parent=39 // pred_fallthru
          _
        // Predicated region
        $region57: #{tpu_custom_call.1} parent=39 // pred_check
          %p368 = pneg %p164
        $region58: #{tpu_custom_call.1} parent=39 // pred_check_branch
          %370 = sbr.rel (%p368) target = $region60
        $region59: #{tpu_custom_call.1} parent=39 // pred_region
          %371 = dma.done [#allocation11], 1024
        $region60: #{tpu_custom_call.1} parent=39 // pred_fallthru
          _
        %s372 = sand.u32 %s53, 1
        %s373 = scalar_lea.sflag [#allocation5], %s372
        %s374 = sand.u32 %s53, 1
        %s375 = smul.addr %s374, 16
        %s376 = scalar_lea.vmem [#allocation4], %s375
        %p377 = pneg %p66
        %p378 = pneg %p63
        %s379 = sand.u32 %s31, 1
        %s380 = scalar_lea.sflag [#allocation8], %s379
        %s381 = sand.u32 %s81, 1
        %s382 = smul.addr %s381, 8
        %s383 = scalar_lea.vmem [#allocation7], %s382
        %p384 = pneg %p94
        %p385 = pneg %p91
        %s386 = sand.u32 %s31, 1
        %s387 = scalar_lea.sflag [#allocation8], %s386
        %s388 = sand.u32 %s109, 1
        %s389 = smul.addr %s388, 8
        %s390 = scalar_lea.vmem [#allocation9], %s389
        %p391 = pneg %p122
        %p392 = pneg %p119
        %p393 = pneg %p143
        %p394 = pneg %p140
        %p395 = pneg %p164
        %p396 = pneg %p161
        %p397 = pneg %p190
        %p398 = pneg %p187
        %s399 = sand.u32 %s177, 1
        %s400 = scalar_lea.sflag [#allocation6], %s399
        %s401 = sand.u32 %s177, 1
        %s402 = smul.addr %s401, 128
        %s403 = scalar_lea.vmem [#allocation13], %s402
        %p404 = pneg %p216
        %p405 = pneg %p213
        %s406 = sand.u32 %s203, 1
        %s407 = scalar_lea.sflag [#allocation15], %s406
        %s408 = sand.u32 %s203, 1
        %s409 = scalar_lea.vmem [#allocation14], %s408
        %s410 = smul.u32 2, %s36
        %s411 = smul.u32 2, %s36
        %s412 = smul.u32 2, %s36
        %p414 = scmp.eq.s32.totalorder %s36, 0
        // Predicated region
        $region61: #{tpu_custom_call.1} parent=39 // pred_check
          %p415 = pneg %p414
        $region62: #{tpu_custom_call.1} parent=39 // pred_check_branch
          %417 = sbr.rel (%p415) target = $region64
        $region63: #{tpu_custom_call.1} parent=39 // pred_region
          %418 = vst [vmem:[#allocation2] sm:$0xff] 0.0
          %419 = vst [vmem:[#allocation2 + $0x8] sm:$0xff] 0.0
          %420 = vst [vmem:[#allocation2 + $0x10] sm:$0xff] 0.0
          %421 = vst [vmem:[#allocation2 + $0x18] sm:$0xff] 0.0
          %422 = vst [vmem:[#allocation2 + $0x20] sm:$0xff] 0.0
          %423 = vst [vmem:[#allocation2 + $0x28] sm:$0xff] 0.0
          %424 = vst [vmem:[#allocation2 + $0x30] sm:$0xff] 0.0
          %425 = vst [vmem:[#allocation2 + $0x38] sm:$0xff] 0.0
          %426 = vst [vmem:[#allocation2 + $0x40] sm:$0xff] 0.0
          %427 = vst [vmem:[#allocation2 + $0x48] sm:$0xff] 0.0
          %428 = vst [vmem:[#allocation2 + $0x50] sm:$0xff] 0.0
          %429 = vst [vmem:[#allocation2 + $0x58] sm:$0xff] 0.0
          %430 = vst [vmem:[#allocation2 + $0x60] sm:$0xff] 0.0
          %431 = vst [vmem:[#allocation2 + $0x68] sm:$0xff] 0.0
          %432 = vst [vmem:[#allocation2 + $0x70] sm:$0xff] 0.0
          %433 = vst [vmem:[#allocation2 + $0x78] sm:$0xff] 0.0
          %434 = vst [vmem:[#allocation3] sm:$0x1] 0.0
        $region64: #{tpu_custom_call.1} parent=39 // pred_fallthru
          _
        %v435 = vld [vmem:[%s341] sm:$0xff]
        %v436 = vld [vmem:[%s341 + $0x8] sm:$0xff]
        %v437 = vpack.c.bf16 %v436, %v435
        %v438 = vld [vmem:[#allocation10] sm:$0xf]
        %v439 = vld [vmem:[#allocation10 + $0x4] sm:$0xf]
        %v440 = vld [vmem:[#allocation10 + $0x8] sm:$0xf]
        %v441 = vld [vmem:[#allocation10 + $0xc] sm:$0xf]
        %v442 = vld [vmem:[#allocation10 + $0x10] sm:$0xf]
        %v443 = vld [vmem:[#allocation10 + $0x14] sm:$0xf]
        %v444 = vld [vmem:[#allocation10 + $0x18] sm:$0xf]
        %v445 = vld [vmem:[#allocation10 + $0x1c] sm:$0xf]
        %v446 = vld [vmem:[#allocation10 + $0x20] sm:$0xf]
        %v447 = vld [vmem:[#allocation10 + $0x24] sm:$0xf]
        %v448 = vld [vmem:[#allocation10 + $0x28] sm:$0xf]
        %v449 = vld [vmem:[#allocation10 + $0x2c] sm:$0xf]
        %v450 = vld [vmem:[#allocation10 + $0x30] sm:$0xf]
        %v451 = vld [vmem:[#allocation10 + $0x34] sm:$0xf]
        %v452 = vld [vmem:[#allocation10 + $0x38] sm:$0xf]
        %v453 = vld [vmem:[#allocation10 + $0x3c] sm:$0xf]
        %v470 = vunpack.c.l.b16 %v438
        %v471 = vunpack.c.l.b16 %v439
        %v472 = vunpack.c.l.b16 %v440
        %v473 = vunpack.c.l.b16 %v441
        %v474 = vunpack.c.l.b16 %v442
        %v475 = vunpack.c.l.b16 %v443
        %v476 = vunpack.c.l.b16 %v444
        %v477 = vunpack.c.l.b16 %v445
        %v478 = vunpack.c.l.b16 %v446
        %v479 = vunpack.c.l.b16 %v447
        %v480 = vunpack.c.l.b16 %v448
        %v481 = vunpack.c.l.b16 %v449
        %v482 = vunpack.c.l.b16 %v450
        %v483 = vunpack.c.l.b16 %v451
        %v484 = vunpack.c.l.b16 %v452
        %v485 = vunpack.c.l.b16 %v453
        %v486 = vpack.c.b16 %v471, %v470
        %v487 = vpack.c.b16 %v473, %v472
        %v488 = vpack.c.b16 %v475, %v474
        %v489 = vpack.c.b16 %v477, %v476
        %v490 = vpack.c.b16 %v479, %v478
        %v491 = vpack.c.b16 %v481, %v480
        %v492 = vpack.c.b16 %v483, %v482
        %v493 = vpack.c.b16 %v485, %v484
        %502 = vmatprep.subr.bf16.mxu0 0
        %503 = vmatpush1.bf16.msra.mxu0 %v493
        %504 = vmatprep.subr.bf16.mxu0 0
        %505 = vmatpush1.bf16.msra.mxu0 %v492
        %506 = vmatprep.subr.bf16.mxu0 0
        %507 = vmatpush1.bf16.msra.mxu0 %v491
        %508 = vmatprep.subr.bf16.mxu0 0
        %509 = vmatpush1.bf16.msra.mxu0 %v490
        %510 = vmatprep.subr.bf16.mxu0 0
        %511 = vmatpush1.bf16.msra.mxu0 %v489
        %512 = vmatprep.subr.bf16.mxu0 0
        %513 = vmatpush1.bf16.msra.mxu0 %v488
        %514 = vmatprep.subr.bf16.mxu0 0
        %515 = vmatpush1.bf16.msra.mxu0 %v487
        %516 = vmatprep.subr.bf16.mxu0 0
        %517 = vmatpush1.bf16.msra.mxu0 %v486
        %518 = vmatprep.subr.bf16.mxu0 0
        %519 = vmatpush2.bf16.msra.mxu0 0
        %520 = vmatprep.subr.bf16.mxu0 0
        %521 = vmatpush2.bf16.msra.mxu0 0
        %522 = vmatprep.subr.bf16.mxu0 0
        %523 = vmatpush2.bf16.msra.mxu0 0
        %524 = vmatprep.subr.bf16.mxu0 0
        %525 = vmatpush2.bf16.msra.mxu0 0
        %526 = vmatprep.subr.bf16.mxu0 0
        %527 = vmatpush2.bf16.msra.mxu0 0
        %528 = vmatprep.subr.bf16.mxu0 0
        %529 = vmatpush2.bf16.msra.mxu0 0
        %530 = vmatprep.subr.bf16.mxu0 0
        %531 = vmatpush2.bf16.msra.mxu0 0
        %532 = vmatprep.subr.bf16.mxu0 0
        %533 = vmatpush2.bf16.msra.mxu0 0
        %534 = vmatprep.mubr.bf16.mxu0 0
        %535 = vmatmul.mubr.bf16.gmra.mxu0 %v437
        %v536 = vpop.f32.mrf.mxu0
        %v537 = vadd.f32 0.0, %v536
        %v538 = vpop.f32.mrf.mxu0
        %v539 = vpop.f32.mrf.mxu0
        %v540 = vadd.f32 0.0, %v539
        %v541 = vpop.f32.mrf.mxu0
        %542 = vdwg.mxu0
        %v543 = vld [vmem:[#allocation12] sm:$0xf]
        %v544 = vld [vmem:[#allocation12 + $0x4] sm:$0xf]
        %v545 = vld [vmem:[#allocation12 + $0x8] sm:$0xf]
        %v546 = vld [vmem:[#allocation12 + $0xc] sm:$0xf]
        %v547 = vld [vmem:[#allocation12 + $0x10] sm:$0xf]
        %v548 = vld [vmem:[#allocation12 + $0x14] sm:$0xf]
        %v549 = vld [vmem:[#allocation12 + $0x18] sm:$0xf]
        %v550 = vld [vmem:[#allocation12 + $0x1c] sm:$0xf]
        %v551 = vld [vmem:[#allocation12 + $0x20] sm:$0xf]
        %v552 = vld [vmem:[#allocation12 + $0x24] sm:$0xf]
        %v553 = vld [vmem:[#allocation12 + $0x28] sm:$0xf]
        %v554 = vld [vmem:[#allocation12 + $0x2c] sm:$0xf]
        %v555 = vld [vmem:[#allocation12 + $0x30] sm:$0xf]
        %v556 = vld [vmem:[#allocation12 + $0x34] sm:$0xf]
        %v557 = vld [vmem:[#allocation12 + $0x38] sm:$0xf]
        %v558 = vld [vmem:[#allocation12 + $0x3c] sm:$0xf]
        %v575 = vunpack.c.l.b16 %v543
        %v576 = vunpack.c.l.b16 %v544
        %v577 = vunpack.c.l.b16 %v545
        %v578 = vunpack.c.l.b16 %v546
        %v579 = vunpack.c.l.b16 %v547
        %v580 = vunpack.c.l.b16 %v548
        %v581 = vunpack.c.l.b16 %v549
        %v582 = vunpack.c.l.b16 %v550
        %v583 = vunpack.c.l.b16 %v551
        %v584 = vunpack.c.l.b16 %v552
        %v585 = vunpack.c.l.b16 %v553
        %v586 = vunpack.c.l.b16 %v554
        %v587 = vunpack.c.l.b16 %v555
        %v588 = vunpack.c.l.b16 %v556
        %v589 = vunpack.c.l.b16 %v557
        %v590 = vunpack.c.l.b16 %v558
        %v591 = vpack.c.b16 %v576, %v575
        %v592 = vpack.c.b16 %v578, %v577
        %v593 = vpack.c.b16 %v580, %v579
        %v594 = vpack.c.b16 %v582, %v581
        %v595 = vpack.c.b16 %v584, %v583
        %v596 = vpack.c.b16 %v586, %v585
        %v597 = vpack.c.b16 %v588, %v587
        %v598 = vpack.c.b16 %v590, %v589
        %607 = vmatprep.subr.bf16.mxu0 0
        %608 = vmatpush1.bf16.msra.mxu0 %v598
        %609 = vmatprep.subr.bf16.mxu0 0
        %610 = vmatpush1.bf16.msra.mxu0 %v597
        %611 = vmatprep.subr.bf16.mxu0 0
        %612 = vmatpush1.bf16.msra.mxu0 %v596
        %613 = vmatprep.subr.bf16.mxu0 0
        %614 = vmatpush1.bf16.msra.mxu0 %v595
        %615 = vmatprep.subr.bf16.mxu0 0
        %616 = vmatpush1.bf16.msra.mxu0 %v594
        %617 = vmatprep.subr.bf16.mxu0 0
        %618 = vmatpush1.bf16.msra.mxu0 %v593
        %619 = vmatprep.subr.bf16.mxu0 0
        %620 = vmatpush1.bf16.msra.mxu0 %v592
        %621 = vmatprep.subr.bf16.mxu0 0
        %622 = vmatpush1.bf16.msra.mxu0 %v591
        %623 = vmatprep.subr.bf16.mxu0 0
        %624 = vmatpush2.bf16.msra.mxu0 0
        %625 = vmatprep.subr.bf16.mxu0 0
        %626 = vmatpush2.bf16.msra.mxu0 0
        %627 = vmatprep.subr.bf16.mxu0 0
        %628 = vmatpush2.bf16.msra.mxu0 0
        %629 = vmatprep.subr.bf16.mxu0 0
        %630 = vmatpush2.bf16.msra.mxu0 0
        %631 = vmatprep.subr.bf16.mxu0 0
        %632 = vmatpush2.bf16.msra.mxu0 0
        %633 = vmatprep.subr.bf16.mxu0 0
        %634 = vmatpush2.bf16.msra.mxu0 0
        %635 = vmatprep.subr.bf16.mxu0 0
        %636 = vmatpush2.bf16.msra.mxu0 0
        %637 = vmatprep.subr.bf16.mxu0 0
        %638 = vmatpush2.bf16.msra.mxu0 0
        %639 = vmatprep.mubr.bf16.mxu0 0
        %640 = vmatmul.mubr.bf16.gmra.mxu0 %v437
        %v641 = vpop.f32.mrf.mxu0
        %v642 = vadd.f32 0.0, %v641
        %v643 = vpop.f32.mrf.mxu0
        %v644 = vpop.f32.mrf.mxu0
        %v645 = vadd.f32 0.0, %v644
        %v646 = vpop.f32.mrf.mxu0
        %647 = vdwg.mxu0
        %vm648 = vcmp.gt.f32.partialorder %v537, 0.0
        %vm649 = vcmp.gt.f32.partialorder %v540, 0.0
        %v650 = vmin.f32 %v537, 0.0
        %v651 = vmin.f32 %v540, 0.0
        %v652 = vmul.f32 %v650, 1.442695
        %v653 = vpow.pop %v652
        %v654 = vmul.f32 %v651, 1.442695
        %v655 = vpow.pop %v654
        %v656 = vsub.f32 %v653, 1.0
        %v657 = vsub.f32 %v655, 1.0
        %v658 = vsel %vm648, %v537, %v656
        %v659 = vsel %vm649, %v540, %v657
        %v660 = vadd.f32 %v658, 1.0
        %v661 = vadd.f32 %v659, 1.0
        %v662 = vlaneseq
        %v663 = vand.u32 %v662, 127
        %vm664 = vcmp.lt.s32.totalorder %v663, 0
        %v665 = vsub.s32 0, %v663
        %v666 = vsel %vm664, %v665, %v663
        %v667 = vshrl.u32 %v666, 1
        %v668 = vand.u32 %v666, 1
        %v669 = vsub.s32 0, %v668
        %v670 = vsel %vm664, %v669, %v668
        %vm671 = vcmp.ne.s32.totalorder %v670, 0
        %vm672 = vcmp.lt.s32.totalorder %v670, 0
        %vm673 = vmand %vm672, %vm671
        %v674 = vadd.s32 %v670, 2
        %v675 = vsel %vm673, %v674, %v670
        %vm676 = vcmp.eq.s32.totalorder %v675, 0
        %v677 = vld [vmem:[%s350] sm:$0xf]
        %v678 = vld [vmem:[%s350 + $0x4] sm:$0xf]
        %v679 = vld [vmem:[%s359] sm:$0xf]
        %v680 = vld [vmem:[%s359 + $0x4] sm:$0xf]
        %v681 = vunpack.c.l.bf16 %v677
        %v682 = vunpack.c.l.bf16 %v678
        %v683 = vmul.f32 %v537, %v681
        %v684 = vmul.f32 %v540, %v682
        %687 = vrot.lane.b32.xlu0 %v537, 127
        %v688 = vpop.permute.xlu0 %687
        %689 = vrot.lane.b32.xlu0 %v540, 127
        %v690 = vpop.permute.xlu0 %689
        %693 = vrot.lane.b32.xlu0 %v537, 1
        %v694 = vpop.permute.xlu0 %693
        %695 = vrot.lane.b32.xlu0 %v540, 1
        %v696 = vpop.permute.xlu0 %695
        %v699 = vsel %vm676, 1, 0
        %vm700 = vcmp.eq.s32.totalorder %v699, 1
        %v701 = vsel %vm700, %v688, %v694
        %v702 = vsel %vm700, %v690, %v696
        %v703 = vunpack.c.l.bf16 %v679
        %v704 = vunpack.c.l.bf16 %v680
        %v705 = vmul.f32 %v701, %v703
        %v706 = vmul.f32 %v702, %v704
        %v707 = vadd.f32 %v683, %v705
        %v708 = vadd.f32 %v684, %v706
        %v709 = vmul.f32 %v642, %v681
        %v710 = vmul.f32 %v645, %v682
        %713 = vrot.lane.b32.xlu0 %v642, 127
        %v714 = vpop.permute.xlu0 %713
        %715 = vrot.lane.b32.xlu0 %v645, 127
        %v716 = vpop.permute.xlu0 %715
        %719 = vrot.lane.b32.xlu0 %v642, 1
        %v720 = vpop.permute.xlu0 %719
        %721 = vrot.lane.b32.xlu0 %v645, 1
        %v722 = vpop.permute.xlu0 %721
        %v725 = vsel %vm700, %v714, %v720
        %v726 = vsel %vm700, %v716, %v722
        %v727 = vmul.f32 %v725, %v703
        %v728 = vmul.f32 %v726, %v704
        %v729 = vadd.f32 %v709, %v727
        %v730 = vadd.f32 %v710, %v728
        %s731 = smul.u32 %s36, 16
        %v732 = vlaneseq
        %v733 = vshrl.u32 %v732, 7
        %v734 = vadd.s32 %v733, 8
        %v735 = vstv %s731
        %v736 = vadd.s32 %v735, %v733
        %v737 = vadd.s32 %v735, %v734
        %vm738 = vcmp.lt.s32.totalorder %v736, 8
        %vm739 = vcmp.lt.s32.totalorder %v737, 8
        %v740 = vsel %vm738, 1, 0
        %v741 = vsel %vm739, 1, 0
        %v742 = vcvt.s32.f32 %v740
        %v743 = vcvt.s32.f32 %v741
        %v744 = vmul.f32 %v660, %v742
        %v745 = vmul.f32 %v661, %v743
        %v746 = vmul.f32 %v707, %v742
        %v747 = vmul.f32 %v708, %v743
        %v748 = vld [vmem:[#allocation3] sm:$0x1]
        %v749 = vadd.f32 %v744, %v745
        %v750 = vrot.slane %v749, 4
        %v751 = vadd.f32 %v749, %v750
        %v752 = vrot.slane %v751, 2
        %v753 = vadd.f32 %v751, %v752
        %v754 = vrot.slane %v753, 1
        %v755 = vadd.f32 %v753, %v754
        %v756 = vadd.f32 %v748, %v755
        %757 = vst [vmem:[#allocation3] sm:$0x1] %v756
        %v758 = vld [vmem:[#allocation2] sm:$0xff]
        %v759 = vld [vmem:[#allocation2 + $0x8] sm:$0xff]
        %v760 = vld [vmem:[#allocation2 + $0x10] sm:$0xff]
        %v761 = vld [vmem:[#allocation2 + $0x18] sm:$0xff]
        %v762 = vld [vmem:[#allocation2 + $0x20] sm:$0xff]
        %v763 = vld [vmem:[#allocation2 + $0x28] sm:$0xff]
        %v764 = vld [vmem:[#allocation2 + $0x30] sm:$0xff]
        %v765 = vld [vmem:[#allocation2 + $0x38] sm:$0xff]
        %v766 = vld [vmem:[#allocation2 + $0x40] sm:$0xff]
        %v767 = vld [vmem:[#allocation2 + $0x48] sm:$0xff]
        %v768 = vld [vmem:[#allocation2 + $0x50] sm:$0xff]
        %v769 = vld [vmem:[#allocation2 + $0x58] sm:$0xff]
        %v770 = vld [vmem:[#allocation2 + $0x60] sm:$0xff]
        %v771 = vld [vmem:[#allocation2 + $0x68] sm:$0xff]
        %v772 = vld [vmem:[#allocation2 + $0x70] sm:$0xff]
        %v773 = vld [vmem:[#allocation2 + $0x78] sm:$0xff]
        %v774 = vpack.c.bf16 %v747, %v746
        %v775 = vpack.c.bf16 %v730, %v729
        %776 = vxpose.xlu0.c.b16.start [1/8] %v774, 128
        %777 = vxpose.xlu0.c.b16.cont [2/8] 0, 128
        %778 = vxpose.xlu0.c.b16.cont [3/8] 0, 128
        %779 = vxpose.xlu0.c.b16.cont [4/8] 0, 128
        %780 = vxpose.xlu0.c.b16.cont [5/8] 0, 128
        %781 = vxpose.xlu0.c.b16.cont [6/8] 0, 128
        %782 = vxpose.xlu0.c.b16.cont [7/8] 0, 128
        %783 = vxpose.xlu0.c.b16.end [8/8] 0, 128
        %v784 = vpop.trf.xlu0
        %v785 = vpop.trf.xlu0
        %v786 = vpop.trf.xlu0
        %v787 = vpop.trf.xlu0
        %v788 = vpop.trf.xlu0
        %v789 = vpop.trf.xlu0
        %v790 = vpop.trf.xlu0
        %v791 = vpop.trf.xlu0
        %vm792 = vcmask 130048
        %v794 = vsel %vm792, %v784, 0
        %v797 = vsel %vm792, %v785, 0
        %v800 = vsel %vm792, %v786, 0
        %v803 = vsel %vm792, %v787, 0
        %v806 = vsel %vm792, %v788, 0
        %v809 = vsel %vm792, %v789, 0
        %v812 = vsel %vm792, %v790, 0
        %v815 = vsel %vm792, %v791, 0
        %817 = vmatprep.subr.bf16.mxu0 0
        %818 = vmatpush1.bf16.msra.mxu0 0
        %819 = vmatprep.subr.bf16.mxu0 0
        %820 = vmatpush1.bf16.msra.mxu0 0
        %821 = vmatprep.subr.bf16.mxu0 0
        %822 = vmatpush1.bf16.msra.mxu0 0
        %823 = vmatprep.subr.bf16.mxu0 0
        %824 = vmatpush1.bf16.msra.mxu0 0
        %825 = vmatprep.subr.bf16.mxu0 0
        %826 = vmatpush1.bf16.msra.mxu0 0
        %827 = vmatprep.subr.bf16.mxu0 0
        %828 = vmatpush1.bf16.msra.mxu0 0
        %829 = vmatprep.subr.bf16.mxu0 0
        %830 = vmatpush1.bf16.msra.mxu0 0
        %831 = vmatprep.subr.bf16.mxu0 0
        %832 = vmatpush1.bf16.msra.mxu0 %v775
        %833 = vmatprep.subr.bf16.mxu0 0
        %834 = vmatpush2.bf16.msra.mxu0 0
        %835 = vmatprep.subr.bf16.mxu0 0
        %836 = vmatpush2.bf16.msra.mxu0 0
        %837 = vmatprep.subr.bf16.mxu0 0
        %838 = vmatpush2.bf16.msra.mxu0 0
        %839 = vmatprep.subr.bf16.mxu0 0
        %840 = vmatpush2.bf16.msra.mxu0 0
        %841 = vmatprep.subr.bf16.mxu0 0
        %842 = vmatpush2.bf16.msra.mxu0 0
        %843 = vmatprep.subr.bf16.mxu0 0
        %844 = vmatpush2.bf16.msra.mxu0 0
        %845 = vmatprep.subr.bf16.mxu0 0
        %846 = vmatpush2.bf16.msra.mxu0 0
        %847 = vmatprep.subr.bf16.mxu0 0
        %848 = vmatpush2.bf16.msra.mxu0 0
        %849 = vmatprep.mubr.bf16.mxu0 0
        %850 = vmatmul.mubr.bf16.gmra.mxu0 %v794
        %v851 = vpop.f32.mrf.mxu0
        %v852 = vadd.f32 0.0, %v851
        %v853 = vpop.f32.mrf.mxu0
        %v854 = vpop.f32.mrf.mxu0
        %v855 = vadd.f32 0.0, %v854
        %v856 = vpop.f32.mrf.mxu0
        %857 = vmatprep.mubr.bf16.mxu0 0
        %858 = vmatmul.mubr.bf16.gmra.mxu0 %v797
        %v859 = vpop.f32.mrf.mxu0
        %v860 = vadd.f32 0.0, %v859
        %v861 = vpop.f32.mrf.mxu0
        %v862 = vpop.f32.mrf.mxu0
        %v863 = vadd.f32 0.0, %v862
        %v864 = vpop.f32.mrf.mxu0
        %865 = vmatprep.mubr.bf16.mxu0 0
        %866 = vmatmul.mubr.bf16.gmra.mxu0 %v800
        %v867 = vpop.f32.mrf.mxu0
        %v868 = vadd.f32 0.0, %v867
        %v869 = vpop.f32.mrf.mxu0
        %v870 = vpop.f32.mrf.mxu0
        %v871 = vadd.f32 0.0, %v870
        %v872 = vpop.f32.mrf.mxu0
        %873 = vmatprep.mubr.bf16.mxu0 0
        %874 = vmatmul.mubr.bf16.gmra.mxu0 %v803
        %v875 = vpop.f32.mrf.mxu0
        %v876 = vadd.f32 0.0, %v875
        %v877 = vpop.f32.mrf.mxu0
        %v878 = vpop.f32.mrf.mxu0
        %v879 = vadd.f32 0.0, %v878
        %v880 = vpop.f32.mrf.mxu0
        %881 = vmatprep.mubr.bf16.mxu0 0
        %882 = vmatmul.mubr.bf16.gmra.mxu0 %v806
        %v883 = vpop.f32.mrf.mxu0
        %v884 = vadd.f32 0.0, %v883
        %v885 = vpop.f32.mrf.mxu0
        %v886 = vpop.f32.mrf.mxu0
        %v887 = vadd.f32 0.0, %v886
        %v888 = vpop.f32.mrf.mxu0
        %889 = vmatprep.mubr.bf16.mxu0 0
        %890 = vmatmul.mubr.bf16.gmra.mxu0 %v809
        %v891 = vpop.f32.mrf.mxu0
        %v892 = vadd.f32 0.0, %v891
        %v893 = vpop.f32.mrf.mxu0
        %v894 = vpop.f32.mrf.mxu0
        %v895 = vadd.f32 0.0, %v894
        %v896 = vpop.f32.mrf.mxu0
        %897 = vmatprep.mubr.bf16.mxu0 0
        %898 = vmatmul.mubr.bf16.gmra.mxu0 %v812
        %v899 = vpop.f32.mrf.mxu0
        %v900 = vadd.f32 0.0, %v899
        %v901 = vpop.f32.mrf.mxu0
        %v902 = vpop.f32.mrf.mxu0
        %v903 = vadd.f32 0.0, %v902
        %v904 = vpop.f32.mrf.mxu0
        %905 = vmatprep.mubr.bf16.mxu0 0
        %906 = vmatmul.mubr.bf16.gmra.mxu0 %v815
        %v907 = vpop.f32.mrf.mxu0
        %v908 = vadd.f32 0.0, %v907
        %v909 = vpop.f32.mrf.mxu0
        %v910 = vpop.f32.mrf.mxu0
        %v911 = vadd.f32 0.0, %v910
        %v912 = vpop.f32.mrf.mxu0
        %913 = vdwg.mxu0
        %v914 = vadd.f32 %v758, %v852
        %v915 = vadd.f32 %v759, %v855
        %v916 = vadd.f32 %v760, %v860
        %v917 = vadd.f32 %v761, %v863
        %v918 = vadd.f32 %v762, %v868
        %v919 = vadd.f32 %v763, %v871
        %v920 = vadd.f32 %v764, %v876
        %v921 = vadd.f32 %v765, %v879
        %v922 = vadd.f32 %v766, %v884
        %v923 = vadd.f32 %v767, %v887
        %v924 = vadd.f32 %v768, %v892
        %v925 = vadd.f32 %v769, %v895
        %v926 = vadd.f32 %v770, %v900
        %v927 = vadd.f32 %v771, %v903
        %v928 = vadd.f32 %v772, %v908
        %v929 = vadd.f32 %v773, %v911
        %930 = vst [vmem:[#allocation2] sm:$0xff] %v914
        %931 = vst [vmem:[#allocation2 + $0x8] sm:$0xff] %v915
        %932 = vst [vmem:[#allocation2 + $0x10] sm:$0xff] %v916
        %933 = vst [vmem:[#allocation2 + $0x18] sm:$0xff] %v917
        %934 = vst [vmem:[#allocation2 + $0x20] sm:$0xff] %v918
        %935 = vst [vmem:[#allocation2 + $0x28] sm:$0xff] %v919
        %936 = vst [vmem:[#allocation2 + $0x30] sm:$0xff] %v920
        %937 = vst [vmem:[#allocation2 + $0x38] sm:$0xff] %v921
        %938 = vst [vmem:[#allocation2 + $0x40] sm:$0xff] %v922
        %939 = vst [vmem:[#allocation2 + $0x48] sm:$0xff] %v923
        %940 = vst [vmem:[#allocation2 + $0x50] sm:$0xff] %v924
        %941 = vst [vmem:[#allocation2 + $0x58] sm:$0xff] %v925
        %942 = vst [vmem:[#allocation2 + $0x60] sm:$0xff] %v926
        %943 = vst [vmem:[#allocation2 + $0x68] sm:$0xff] %v927
        %944 = vst [vmem:[#allocation2 + $0x70] sm:$0xff] %v928
        %945 = vst [vmem:[#allocation2 + $0x78] sm:$0xff] %v929
        // Predicated region
        $region65: #{tpu_custom_call.1} parent=39 // pred_check
          %p946 = pneg %p414
        $region66: #{tpu_custom_call.1} parent=39 // pred_check_branch
          %948 = sbr.rel (%p946) target = $region68
        $region67: #{tpu_custom_call.1} parent=39 // pred_region
          %v949 = vld [vmem:[#allocation2] sm:$0xff]
          %v950 = vld [vmem:[#allocation2 + $0x8] sm:$0xff]
          %v951 = vld [vmem:[#allocation2 + $0x10] sm:$0xff]
          %v952 = vld [vmem:[#allocation2 + $0x18] sm:$0xff]
          %v953 = vld [vmem:[#allocation2 + $0x20] sm:$0xff]
          %v954 = vld [vmem:[#allocation2 + $0x28] sm:$0xff]
          %v955 = vld [vmem:[#allocation2 + $0x30] sm:$0xff]
          %v956 = vld [vmem:[#allocation2 + $0x38] sm:$0xff]
          %v957 = vld [vmem:[#allocation2 + $0x40] sm:$0xff]
          %v958 = vld [vmem:[#allocation2 + $0x48] sm:$0xff]
          %v959 = vld [vmem:[#allocation2 + $0x50] sm:$0xff]
          %v960 = vld [vmem:[#allocation2 + $0x58] sm:$0xff]
          %v961 = vld [vmem:[#allocation2 + $0x60] sm:$0xff]
          %v962 = vld [vmem:[#allocation2 + $0x68] sm:$0xff]
          %v963 = vld [vmem:[#allocation2 + $0x70] sm:$0xff]
          %v964 = vld [vmem:[#allocation2 + $0x78] sm:$0xff]
          %965 = vst [vmem:[%s403] sm:$0xff] %v949
          %966 = vst [vmem:[%s403 + $0x8] sm:$0xff] %v950
          %967 = vst [vmem:[%s403 + $0x10] sm:$0xff] %v951
          %968 = vst [vmem:[%s403 + $0x18] sm:$0xff] %v952
          %969 = vst [vmem:[%s403 + $0x20] sm:$0xff] %v953
          %970 = vst [vmem:[%s403 + $0x28] sm:$0xff] %v954
          %971 = vst [vmem:[%s403 + $0x30] sm:$0xff] %v955
          %972 = vst [vmem:[%s403 + $0x38] sm:$0xff] %v956
          %973 = vst [vmem:[%s403 + $0x40] sm:$0xff] %v957
          %974 = vst [vmem:[%s403 + $0x48] sm:$0xff] %v958
          %975 = vst [vmem:[%s403 + $0x50] sm:$0xff] %v959
          %976 = vst [vmem:[%s403 + $0x58] sm:$0xff] %v960
          %977 = vst [vmem:[%s403 + $0x60] sm:$0xff] %v961
          %978 = vst [vmem:[%s403 + $0x68] sm:$0xff] %v962
          %979 = vst [vmem:[%s403 + $0x70] sm:$0xff] %v963
          %980 = vst [vmem:[%s403 + $0x78] sm:$0xff] %v964
          %v981 = vld [vmem:[#allocation3] sm:$0x1]
          %982 = vst [vmem:[%s409] sm:$0x1] %v981
        $region68: #{tpu_custom_call.1} parent=39 // pred_fallthru
          _
        %s983 = sand.u32 %s177, 1
        %s984 = scalar_lea.sflag [#allocation6], %s983
        %s985 = sand.u32 %s177, 1
        %s986 = smul.addr %s985, 128
        %s987 = scalar_lea.vmem [#allocation13], %s986
        %s988 = sand.u32 %s203, 1
        %s989 = scalar_lea.sflag [#allocation15], %s988
        %s990 = sand.u32 %s203, 1
        %s991 = scalar_lea.vmem [#allocation14], %s990
        // Predicated region
        $region69: #{tpu_custom_call.1} parent=39 // pred_check
          %p992 = pneg %p187
        $region70: #{tpu_custom_call.1} parent=39 // pred_check_branch
          %994 = sbr.rel (%p992) target = $region72
        $region71: #{tpu_custom_call.1} parent=39 // pred_region
          %s996 = ssub.s32 2048, 2048
          %997 = vsyncadd %s984, %s996
          %s998 = smul.addr %s35, 16
          %s999 = smul.addr %s998, 128
          %s1000 = scalar_lea.hbm %s5, %s999
          %s1001 = sshll.u32 %s987, 4
          %s1002 = int_to_ptr.vmem [resolvable:$true] %s1001
          %1007 = dma.vmem_to_hbm [thread:$0]  %s1002, 2048, %s1000, %s984, 128, 128, 8
        $region72: #{tpu_custom_call.1} parent=39 // pred_fallthru
          _
        // Predicated region
        $region73: #{tpu_custom_call.1} parent=39 // pred_check
          %p1008 = pneg %p213
        $region74: #{tpu_custom_call.1} parent=39 // pred_check_branch
          %1010 = sbr.rel (%p1008) target = $region76
        $region75: #{tpu_custom_call.1} parent=39 // pred_region
          %s1012 = ssub.s32 16, 16
          %1013 = vsyncadd %s989, %s1012
          %s1014 = smul.addr %s35, 16
          %s1015 = scalar_lea.hbm %s6, %s1014
          %s1017 = sshll.u32 %s991, 4
          %s1018 = int_to_ptr.vmem [resolvable:$true] %s1017
          %1020 = dma.vmem_to_hbm [thread:$0]  %s1018, 16, %s1015, %s989
        $region76: #{tpu_custom_call.1} parent=39 // pred_fallthru
          _
      $region40: #{tpu_custom_call.1} parent=5 // pred_fallthru
        _
      %p1021 = scmp.le.s32.totalorder 2, %s26
      // Predicated region
      $region77: #{tpu_custom_call.1} parent=5 // pred_check
        %p1022 = pneg %p1021
      $region78: #{tpu_custom_call.1} parent=5 // pred_check_branch
        %1024 = sbr.rel (%p1022) target = $region80
      $region79: #{tpu_custom_call.1} parent=5 // pred_region
        %s1025 = ssub.s32 %s26, 2
        // Predicated region
        $region81: #{tpu_custom_call.1} parent=79 // pred_check
          %p1026 = pneg %p193
        $region82: #{tpu_custom_call.1} parent=79 // pred_check_branch
          %1028 = sbr.rel (%p1026) target = $region84
        $region83: #{tpu_custom_call.1} parent=79 // pred_region
          %s1029 = sand.u32 %s178, 1
          %s1030 = scalar_lea.sflag [#allocation6], %s1029
          %s1031 = sand.u32 %s178, 1
          %s1032 = smul.addr %s1031, 128
          %s1033 = scalar_lea.vmem [#allocation13], %s1032
          %1034 = dma.done %s1030, 2048
        $region84: #{tpu_custom_call.1} parent=79 // pred_fallthru
          _
        // Predicated region
        $region85: #{tpu_custom_call.1} parent=79 // pred_check
          %p1035 = pneg %p219
        $region86: #{tpu_custom_call.1} parent=79 // pred_check_branch
          %1037 = sbr.rel (%p1035) target = $region88
        $region87: #{tpu_custom_call.1} parent=79 // pred_region
          %s1038 = sand.u32 %s204, 1
          %s1039 = scalar_lea.sflag [#allocation15], %s1038
          %s1040 = sand.u32 %s204, 1
          %s1041 = scalar_lea.vmem [#allocation14], %s1040
          %1042 = dma.done %s1039, 16
        $region88: #{tpu_custom_call.1} parent=79 // pred_fallthru
          _
      $region80: #{tpu_custom_call.1} parent=5 // pred_fallthru
        _
    $region6: #{tpu_custom_call.1} parent=1 // loop_footer
      %s30 = sadd.s32 1, %s26
    $region7: #{tpu_custom_call.1} parent=1 // loop_footer_branch
      %25 = sbr.rel target = $region3
    $region8: #{tpu_custom_call.1} parent=1 // loop_exit
      _
    %1043 = vsyncpa [#allocation5], 1
    %s1044 = scalar_lea.sflag [#allocation5], 1
    %1045 = vsyncpa %s1044, 1
    %1046 = vsyncpa [#allocation8], 1
    %s1047 = scalar_lea.sflag [#allocation8], 1
    %1048 = vsyncpa %s1047, 1
    %1049 = vsyncpa [#allocation11], 1
    %1050 = vsyncpa [#allocation6], 1
    %s1051 = scalar_lea.sflag [#allocation6], 1
    %1052 = vsyncpa %s1051, 1
    %1053 = vsyncpa [#allocation15], 1
    %s1054 = scalar_lea.sflag [#allocation15], 1
    %1055 = vsyncpa %s1054, 1

</llo_original>
